<compile_context>
chip_gen: v5e
topology: v5e:2x2
jax: 0.10.0
libtpu: 0.0.40
codegen_flags: <defaults>
</compile_context>

<pallas_src>
import functools

import jax
import jax.numpy as jnp
from jax.experimental import pallas as pl
from jax.experimental.pallas import tpu as pltpu


def _round_up(v, m):
    return (v + m - 1) // m * m


def _layer_math(xin_bf16, theta_bf16, bias, gamma, beta, agg, n_valid, inv_n):
    """Shared per-layer math: x @ theta -> hypergraph aggregation -> +bias -> tanh -> BN."""
    # x1 = X @ Theta                       (MXU, f32 accumulate)
    x1 = jnp.dot(xin_bf16, theta_bf16, preferred_element_type=jnp.float32)
    # conv = (normalized hypergraph aggregation of x1) + bias
    conv = agg(x1.astype(jnp.bfloat16)) + bias
    t = jnp.tanh(conv)
    # BatchNorm1d, training-mode batch statistics over the *valid* rows only.
    # Row mask generated in-kernel: rows >= n_valid are zero-padded and excluded.
    row = jax.lax.broadcasted_iota(jnp.int32, t.shape, 0)
    m = jnp.where(row < n_valid, jnp.float32(inv_n), jnp.float32(0.0))
    mean = jnp.sum(t * m, axis=0, keepdims=True)            # [1, C_pad]
    d = t - mean
    var = jnp.sum(d * d * m, axis=0, keepdims=True)         # biased variance
    return d * jax.lax.rsqrt(var + 1e-5) * gamma + beta


def _kernel_p(p_ref, x0_ref, theta_ref, bias_ref, gamma_ref, beta_ref,
              out_ref, state_ref, *, n_valid, inv_n):
    """Fused layer loop using the precomputed propagation matrix P = Dinv H Binv H^T."""
    @pl.when(pl.program_id(0) == 0)
    def _():
        state_ref[...] = x0_ref[...]

    def agg(x1b):
        return jnp.dot(p_ref[...], x1b, preferred_element_type=jnp.float32)

    y = _layer_math(state_ref[...], theta_ref[0], bias_ref[0], gamma_ref[0], beta_ref[0],
                    agg, n_valid, inv_n)
    state_ref[...] = y.astype(state_ref.dtype)   # bf16 carry to next layer
    out_ref[0] = y                               # per-layer f32 output slab


def _kernel_hh(ht_ref, hd_ref, x0_ref, theta_ref, bias_ref, gamma_ref, beta_ref,
               out_ref, state_ref, *, n_valid, inv_n):
    """Fused layer loop using the two scaled incidence matmuls (used when N >> E)."""
    @pl.when(pl.program_id(0) == 0)
    def _():
        state_ref[...] = x0_ref[...]

    def agg(x1b):
        edge = jnp.dot(ht_ref[...], x1b, preferred_element_type=jnp.float32)     # B^-1 H^T x1
        return jnp.dot(hd_ref[...], edge.astype(jnp.bfloat16),                    # D^-1 H edge
                       preferred_element_type=jnp.float32)

    y = _layer_math(state_ref[...], theta_ref[0], bias_ref[0], gamma_ref[0], beta_ref[0],
                    agg, n_valid, inv_n)
    state_ref[...] = y.astype(state_ref.dtype)
    out_ref[0] = y


def hgnn_encoder_forward(x, edge_HGW, weight, params):
    """Reproduces HgnnEncoder.forward: returns the list x_HY of per-layer outputs.

    x        : [N, Cin] node features
    edge_HGW : [2, nnz] hyperedge index (row 0 = node idx, row 1 = edge idx)
    weight   : [E] hyperedge weights
    params   : list of (theta [Cin_l, Cout], bias [Cout], gamma [Cout], beta [Cout])
    """
    N, Cin = x.shape
    nlayer = len(params)
    Cout = params[0][0].shape[1]
    E = int(weight.shape[0])

    # ---------------- JAX glue: constant (layer-independent) operands -----------------
    H = jnp.zeros((N, E), jnp.float32).at[edge_HGW[0], edge_HGW[1]].set(1.0)
    w = weight.reshape(1, E).astype(jnp.float32)
    D = jnp.sum(H * w, axis=1, keepdims=True)                  # [N, 1] weighted node degree
    Dinv = jnp.where(D > 0.0, 1.0 / D, 0.0)
    B = jnp.sum(H, axis=0, keepdims=True)                      # [1, E] hyperedge degree
    Binv = jnp.where(B > 0.0, 1.0 / B, 0.0)
    # Hyperedge weight enters through D only (PyG >= 2.x code path).
    H_d = H * Dinv                                             # [N, E]
    HT_s = (H * Binv).T                                        # [E, N]

    # Lane-dense padded shapes: N (and E, channels) padded to multiples of 128 so the MXU
    # sees full K/lane tiles and stores are unmasked.
    N_pad = _round_up(max(N, 128), 128)
    E_pad = _round_up(max(E, 128), 128)
    C_pad = _round_up(max(Cin, Cout, 128), 128)

    # Structural choice: P = Dinv H Binv H^T ([N, N]) beats the two incidence matmuls
    # (N*N*C vs 2*N*E*C MACs, N*N vs 2*N*E resident bf16) whenever N <= ~2E.
    use_p = N_pad <= 2 * E_pad
    if use_p:
        P = jnp.dot(H_d, HT_s)                                 # f32, computed once
        P_p = jnp.zeros((N_pad, N_pad), jnp.bfloat16).at[:N, :N].set(P.astype(jnp.bfloat16))
    else:
        HT_p = jnp.zeros((E_pad, N_pad), jnp.bfloat16).at[:E, :N].set(HT_s.astype(jnp.bfloat16))
        Hd_p = jnp.zeros((N_pad, E_pad), jnp.bfloat16).at[:N, :E].set(H_d.astype(jnp.bfloat16))

    # bf16 x0 (it is only ever consumed as a bf16 MXU operand).
    x0 = jnp.zeros((N_pad, C_pad), jnp.bfloat16).at[:N, :Cin].set(x.astype(jnp.bfloat16))

    # Stacked per-layer parameters.
    thetas = jnp.zeros((nlayer, C_pad, C_pad), jnp.bfloat16)
    biases = jnp.zeros((nlayer, 1, C_pad), jnp.float32)
    gammas = jnp.zeros((nlayer, 1, C_pad), jnp.float32)
    betas = jnp.zeros((nlayer, 1, C_pad), jnp.float32)
    for l, (theta, bias, gamma, beta) in enumerate(params):
        ci, co = theta.shape
        thetas = thetas.at[l, :ci, :co].set(theta.astype(jnp.bfloat16))
        biases = biases.at[l, 0, :co].set(bias.reshape(-1).astype(jnp.float32))
        gammas = gammas.at[l, 0, :co].set(gamma.reshape(-1).astype(jnp.float32))
        betas = betas.at[l, 0, :co].set(beta.reshape(-1).astype(jnp.float32))

    # ---------------- VMEM budget (per-generation, not a flat constant) ----------------
    resident = (N_pad * N_pad * 2 + N_pad * C_pad * 2) if use_p else \
               (2 * E_pad * N_pad * 2 + N_pad * C_pad * 2)          # single-buffered
    per_layer = 2 * (C_pad * C_pad * 2) + 3 * 2 * (C_pad * 4) + 2 * (N_pad * C_pad * 4)
    scratch = N_pad * C_pad * 2                                      # bf16 state carry
    interm = (N_pad + E_pad) * C_pad * 8                             # x1/edge/conv/BN temps
    needed = resident + per_layer + scratch + interm
    try:
        vmem_cap = int(pltpu.get_tpu_info().vmem_capacity_bytes)     # 128 MiB v5e/v6e, 64 MiB v7x
    except Exception:
        vmem_cap = 128 * 1024 * 1024
    vmem_limit = int(min(0.85 * vmem_cap, max(needed + (8 << 20), 48 << 20)))
    # TODO(synk): if `needed` exceeds ~0.85 * VMEM capacity, fall back to an E-tiled
    #             ('arbitrary', accumulated) variant instead of relying on this budget.

    kern = functools.partial(_kernel_p if use_p else _kernel_hh,
                             n_valid=N, inv_n=1.0 / float(N))
    if use_p:
        operands = (P_p, x0, thetas, biases, gammas, betas)
        resident_shapes = [(N_pad, N_pad), (N_pad, C_pad)]
    else:
        operands = (HT_p, Hd_p, x0, thetas, biases, gammas, betas)
        resident_shapes = [(E_pad, N_pad), (N_pad, E_pad), (N_pad, C_pad)]

    def build(single_buffer_residents):
        def res_spec(shape):
            # Layer-invariant residents: constant index map; single-buffer if supported.
            if single_buffer_residents:
                return pl.BlockSpec(shape, lambda l, s=shape: (0,) * len(s),
                                    pipeline_mode=pl.Buffered(1))
            return pl.BlockSpec(shape, lambda l, s=shape: (0,) * len(s))

        in_specs = [res_spec(s) for s in resident_shapes] + [
            pl.BlockSpec((1, C_pad, C_pad), lambda l: (l, 0, 0)),   # theta_l (double-buffered)
            pl.BlockSpec((1, 1, C_pad), lambda l: (l, 0, 0)),       # bias_l
            pl.BlockSpec((1, 1, C_pad), lambda l: (l, 0, 0)),       # gamma_l
            pl.BlockSpec((1, 1, C_pad), lambda l: (l, 0, 0)),       # beta_l
        ]
        return pl.pallas_call(
            kern,
            out_shape=jax.ShapeDtypeStruct((nlayer, N_pad, C_pad), jnp.float32),
            grid_spec=pltpu.PrefetchScalarGridSpec(
                num_scalar_prefetch=0,
                grid=(nlayer,),
                in_specs=in_specs,
                out_specs=pl.BlockSpec((1, N_pad, C_pad), lambda l: (l, 0, 0)),
                scratch_shapes=[pltpu.VMEM((N_pad, C_pad), jnp.bfloat16)],  # carried state
            ),
            compiler_params=pltpu.CompilerParams(
                dimension_semantics=("arbitrary",),       # layer loop carries state
                vmem_limit_bytes=vmem_limit,
            ),
        )

    try:
        stacked = build(True)(*operands)
    except Exception:
        # Fallback for JAX builds without BlockSpec pipeline_mode / pl.Buffered support.
        stacked = build(False)(*operands)

    # Strip padding; return the list of per-layer outputs like the PyTorch forward.
    return [stacked[l, :N, :Cout] for l in range(nlayer)]


def _reference_forward(x, edge_HGW, weight, params):
    """Pure-JAX reference mirroring the kernel's math (same bf16 casts / layer carry)."""
    N, Cin = x.shape
    E = int(weight.shape[0])
    Cout = params[0][0].shape[1]
    H = jnp.zeros((N, E), jnp.float32).at[edge_HGW[0], edge_HGW[1]].set(1.0)
    w = weight.reshape(1, E).astype(jnp.float32)
    D = jnp.sum(H * w, axis=1, keepdims=True)
    Dinv = jnp.where(D > 0.0, 1.0 / D, 0.0)
    B = jnp.sum(H, axis=0, keepdims=True)
    Binv = jnp.where(B > 0.0, 1.0 / B, 0.0)
    H_d = H * Dinv
    HT_s = (H * Binv).T
    N_pad = _round_up(max(N, 128), 128)
    E_pad = _round_up(max(E, 128), 128)
    use_p = N_pad <= 2 * E_pad
    P = jnp.dot(H_d, HT_s).astype(jnp.bfloat16)
    xi = x.astype(jnp.bfloat16)
    outs = []
    for (theta, bias, gamma, beta) in params:
        x1 = jnp.dot(xi, theta.astype(jnp.bfloat16), preferred_element_type=jnp.float32)
        if use_p:
            conv = jnp.dot(P, x1.astype(jnp.bfloat16), preferred_element_type=jnp.float32)
        else:
            edge = jnp.dot(HT_s.astype(jnp.bfloat16), x1.astype(jnp.bfloat16),
                           preferred_element_type=jnp.float32)
            conv = jnp.dot(H_d.astype(jnp.bfloat16), edge.astype(jnp.bfloat16),
                           preferred_element_type=jnp.float32)
        conv = conv + bias.reshape(1, -1)
        t = jnp.tanh(conv)
        mean = jnp.mean(t, axis=0, keepdims=True)
        var = jnp.mean((t - mean) ** 2, axis=0, keepdims=True)
        y = (t - mean) * jax.lax.rsqrt(var + 1e-5) * gamma.reshape(1, -1) + beta.reshape(1, -1)
        outs.append(y)
        xi = y.astype(jnp.bfloat16)
    return outs


if __name__ == "__main__":
    # Small synthetic problem consistent with the module's forward:
    #   N nodes, E hyperedges, in_channels -> out_channels, nlayer layers.
    N, E, Cin, Cout, nlayer = 32, 16, 16, 32, 2
    nodes_per_edge = 4

    key = jax.random.PRNGKey(0)
    k_idx, k_w, k_x, k_par = jax.random.split(key, 4)

    # args.edge_HGW : hyperedge_index [2, nnz]  (row 0 = node index, row 1 = edge index)
    node_idx = jax.random.randint(k_idx, (E * nodes_per_edge,), 0, N)
    edge_idx = jnp.repeat(jnp.arange(E), nodes_per_edge)
    edge_HGW = jnp.stack([node_idx, edge_idx]).astype(jnp.int32)
    # args.weight : hyperedge weights [E]
    weight = jax.random.uniform(k_w, (E,), minval=0.5, maxval=1.5).astype(jnp.float32)
    # node features
    x = jax.random.normal(k_x, (N, Cin), dtype=jnp.float32)

    # Deterministic parameter init (shapes from HypergraphConv / BatchNorm1d __init__).
    params = []
    cin = Cin
    for i in range(nlayer):
        kt = jax.random.fold_in(k_par, i)
        theta = jax.random.normal(kt, (cin, Cout), jnp.float32) / jnp.sqrt(float(cin))
        bias = jnp.zeros((Cout,), jnp.float32)    # HypergraphConv bias
        gamma = jnp.ones((Cout,), jnp.float32)    # BatchNorm1d weight
        beta = jnp.zeros((Cout,), jnp.float32)    # BatchNorm1d bias
        params.append((theta, bias, gamma, beta))
        cin = Cout

    x_HY = hgnn_encoder_forward(x, edge_HGW, weight, params)
    for y in x_HY:
        jax.block_until_ready(y)

    assert len(x_HY) == nlayer and all(y.shape == (N, Cout) for y in x_HY)
    assert all(bool(jnp.all(jnp.isfinite(y))) for y in x_HY)

    # Tolerance-asserted pure-JAX reference comparison (bf16-matched math).
    refs = _reference_forward(x, edge_HGW, weight, params)
    for y, r in zip(x_HY, refs):
        assert bool(jnp.allclose(y, r, atol=5e-2, rtol=5e-2)), \
            float(jnp.max(jnp.abs(y - r)))

    print("KERNEL_OK")
</pallas_src>

<mosaic_0001>
module attributes {stable_mosaic.version = 11 : i64} {
  func.func @_kernel_p(%arg0: i32, %arg1: memref<128x128xbf16, #tpu.memory_space<vmem>>, %arg2: memref<128x128xbf16, #tpu.memory_space<vmem>>, %arg3: memref<1x128x128xbf16, #tpu.memory_space<vmem>>, %arg4: memref<1x1x128xf32, #tpu.memory_space<vmem>>, %arg5: memref<1x1x128xf32, #tpu.memory_space<vmem>>, %arg6: memref<1x1x128xf32, #tpu.memory_space<vmem>>, %arg7: memref<1x128x128xf32, #tpu.memory_space<vmem>>, %arg8: memref<128x128xbf16, #tpu.memory_space<vmem>>) attributes {dimension_semantics = [#tpu.dimension_semantics<arbitrary>], iteration_bounds = array<i64: 2>, scalar_prefetch = 0 : i64, scratch_operands = 1 : i64, tpu.core_type = #tpu.core_type<tc>, window_params = [{pipeline_mode = #tpu.pipeline_mode<synchronous>, transform_indices = @transform_0, window_bounds = array<i64: 128, 128>}, {pipeline_mode = #tpu.pipeline_mode<synchronous>, transform_indices = @transform_1, window_bounds = array<i64: 128, 128>}, {transform_indices = @transform_2, window_bounds = array<i64: 1, 128, 128>}, {transform_indices = @transform_3, window_bounds = array<i64: 1, 1, 128>}, {transform_indices = @transform_4, window_bounds = array<i64: 1, 1, 128>}, {transform_indices = @transform_5, window_bounds = array<i64: 1, 1, 128>}, {transform_indices = @transform_6, window_bounds = array<i64: 1, 128, 128>}]} {
    %c0_i32 = arith.constant 0 : i32
    %0 = arith.cmpi eq, %arg0, %c0_i32 : i32
    %1 = arith.extui %0 : i1 to i32
    %c0_i32_0 = arith.constant 0 : i32
    %2 = arith.cmpi ne, %1, %c0_i32_0 : i32
    scf.if %2 {
      %c0_27 = arith.constant 0 : index
      %c0_28 = arith.constant 0 : index
      %48 = vector.load %arg2[%c0_27, %c0_28] : memref<128x128xbf16, #tpu.memory_space<vmem>>, vector<128x128xbf16>
      %c0_29 = arith.constant 0 : index
      %c0_30 = arith.constant 0 : index
      %49 = vector.load %arg8[%c0_29, %c0_30] : memref<128x128xbf16, #tpu.memory_space<vmem>>, vector<128x128xbf16>
      tpu.vector_store %arg8[%c0_29, %c0_30], %48 {strides = array<i32>} : memref<128x128xbf16, #tpu.memory_space<vmem>>, vector<128x128xbf16>,
    } else {
    }
    %c0 = arith.constant 0 : index
    %c0_1 = arith.constant 0 : index
    %3 = vector.load %arg8[%c0, %c0_1] : memref<128x128xbf16, #tpu.memory_space<vmem>>, vector<128x128xbf16>
    %c0_2 = arith.constant 0 : index
    %c0_3 = arith.constant 0 : index
    %c0_4 = arith.constant 0 : index
    %4 = vector.load %arg3[%c0_2, %c0_3, %c0_4] : memref<1x128x128xbf16, #tpu.memory_space<vmem>>, vector<1x128x128xbf16>
    %5 = vector.shape_cast %4 : vector<1x128x128xbf16> to vector<128x128xbf16>
    %c0_5 = arith.constant 0 : index
    %c0_6 = arith.constant 0 : index
    %c0_7 = arith.constant 0 : index
    %6 = vector.load %arg4[%c0_5, %c0_6, %c0_7] : memref<1x1x128xf32, #tpu.memory_space<vmem>>, vector<1x1x128xf32>
    %7 = vector.shape_cast %6 : vector<1x1x128xf32> to vector<1x128xf32>
    %c0_8 = arith.constant 0 : index
    %c0_9 = arith.constant 0 : index
    %c0_10 = arith.constant 0 : index
    %8 = vector.load %arg5[%c0_8, %c0_9, %c0_10] : memref<1x1x128xf32, #tpu.memory_space<vmem>>, vector<1x1x128xf32>
    %9 = vector.shape_cast %8 : vector<1x1x128xf32> to vector<1x128xf32>
    %c0_11 = arith.constant 0 : index
    %c0_12 = arith.constant 0 : index
    %c0_13 = arith.constant 0 : index
    %10 = vector.load %arg6[%c0_11, %c0_12, %c0_13] : memref<1x1x128xf32, #tpu.memory_space<vmem>>, vector<1x1x128xf32>
    %11 = vector.shape_cast %10 : vector<1x1x128xf32> to vector<1x128xf32>
    %cst = arith.constant dense<0.000000e+00> : vector<128x128xf32>
    %12 = tpu.matmul %3, %5, %cst {dimension_numbers = #tpu.dot_dimension_numbers<[1], [0], [0], [1], [0, 0, 1, 1], [], []>} : vector<128x128xbf16>, vector<128x128xbf16>, vector<128x128xf32> -> vector<128x128xf32>
    %13 = arith.truncf %12 : vector<128x128xf32> to vector<128x128xbf16>
    %c0_14 = arith.constant 0 : index
    %c0_15 = arith.constant 0 : index
    %14 = vector.load %arg1[%c0_14, %c0_15] : memref<128x128xbf16, #tpu.memory_space<vmem>>, vector<128x128xbf16>
    %cst_16 = arith.constant dense<0.000000e+00> : vector<128x128xf32>
    %15 = tpu.matmul %14, %13, %cst_16 {dimension_numbers = #tpu.dot_dimension_numbers<[1], [0], [0], [1], [0, 0, 1, 1], [], []>} : vector<128x128xbf16>, vector<128x128xbf16>, vector<128x128xf32> -> vector<128x128xf32>
    %16 = vector.broadcast %7 : vector<1x128xf32> to vector<128x128xf32>
    %17 = arith.addf %15, %16 : vector<128x128xf32>
    %18 = math.tanh %17 : vector<128x128xf32>
    %19 = tpu.iota {dimensions = array<i32: 0>} : vector<128x128xi32>
    %c32_i32 = arith.constant 32 : i32
    %20 = vector.broadcast %c32_i32 : i32 to vector<128x128xi32>
    %21 = arith.cmpi slt, %19, %20 : vector<128x128xi32>
    %cst_17 = arith.constant 3.125000e-02 : f32
    %cst_18 = arith.constant 0.000000e+00 : f32
    %22 = vector.broadcast %cst_17 : f32 to vector<128x128xf32>
    %23 = vector.broadcast %cst_18 : f32 to vector<128x128xf32>
    %24 = arith.select %21, %22, %23 : vector<128x128xi1>, vector<128x128xf32>
    %25 = arith.mulf %18, %24 : vector<128x128xf32>
    %cst_19 = arith.constant dense<0.000000e+00> : vector<128xf32>
    %26 = vector.multi_reduction <add>, %25, %cst_19 [0] : vector<128x128xf32> to vector<128xf32>
    %27 = vector.shape_cast %26 : vector<128xf32> to vector<1x128xf32>
    %28 = vector.broadcast %27 : vector<1x128xf32> to vector<128x128xf32>
    %29 = arith.subf %18, %28 : vector<128x128xf32>
    %30 = arith.mulf %29, %29 : vector<128x128xf32>
    %31 = arith.mulf %30, %24 : vector<128x128xf32>
    %cst_20 = arith.constant dense<0.000000e+00> : vector<128xf32>
    %32 = vector.multi_reduction <add>, %31, %cst_20 [0] : vector<128x128xf32> to vector<128xf32>
    %33 = vector.shape_cast %32 : vector<128xf32> to vector<1x128xf32>
    %cst_21 = arith.constant 9.99999974E-6 : f32
    %34 = vector.broadcast %cst_21 : f32 to vector<1x128xf32>
    %35 = arith.addf %33, %34 : vector<1x128xf32>
    %36 = math.rsqrt %35 : vector<1x128xf32>
    %37 = vector.broadcast %36 : vector<1x128xf32> to vector<128x128xf32>
    %38 = arith.mulf %29, %37 : vector<128x128xf32>
    %39 = vector.broadcast %9 : vector<1x128xf32> to vector<128x128xf32>
    %40 = arith.mulf %38, %39 : vector<128x128xf32>
    %41 = vector.broadcast %11 : vector<1x128xf32> to vector<128x128xf32>
    %42 = arith.addf %40, %41 : vector<128x128xf32>
    %43 = arith.truncf %42 : vector<128x128xf32> to vector<128x128xbf16>
    %c0_22 = arith.constant 0 : index
    %c0_23 = arith.constant 0 : index
    %44 = vector.load %arg8[%c0_22, %c0_23] : memref<128x128xbf16, #tpu.memory_space<vmem>>, vector<128x128xbf16>
    tpu.vector_store %arg8[%c0_22, %c0_23], %43 {strides = array<i32>} : memref<128x128xbf16, #tpu.memory_space<vmem>>, vector<128x128xbf16>,
    %c0_24 = arith.constant 0 : index
    %c0_25 = arith.constant 0 : index
    %c0_26 = arith.constant 0 : index
    %45 = vector.load %arg7[%c0_24, %c0_25, %c0_26] : memref<1x128x128xf32, #tpu.memory_space<vmem>>, vector<1x128x128xf32>
    %46 = vector.shape_cast %45 : vector<1x128x128xf32> to vector<128x128xf32>
    %47 = vector.shape_cast %42 : vector<128x128xf32> to vector<1x128x128xf32>
    tpu.vector_store %arg7[%c0_24, %c0_25, %c0_26], %47 {strides = array<i32>} : memref<1x128x128xf32, #tpu.memory_space<vmem>>, vector<1x128x128xf32>,
    return
  }
  func.func @transform_0(%arg0: i32) -> (i32, i32) {
    %c0_i32 = arith.constant 0 : i32
    %c0_i32_0 = arith.constant 0 : i32
    %c0_i32_1 = arith.constant 0 : i32
    return %c0_i32, %c0_i32_0 : i32, i32
  }
  func.func @transform_1(%arg0: i32) -> (i32, i32) {
    %c0_i32 = arith.constant 0 : i32
    %c0_i32_0 = arith.constant 0 : i32
    %c0_i32_1 = arith.constant 0 : i32
    return %c0_i32, %c0_i32_0 : i32, i32
  }
  func.func @transform_2(%arg0: i32) -> (i32, i32, i32) {
    %c0_i32 = arith.constant 0 : i32
    %c0_i32_0 = arith.constant 0 : i32
    %c0_i32_1 = arith.constant 0 : i32
    return %arg0, %c0_i32, %c0_i32_0 : i32, i32, i32
  }
  func.func @transform_3(%arg0: i32) -> (i32, i32, i32) {
    %c0_i32 = arith.constant 0 : i32
    %c0_i32_0 = arith.constant 0 : i32
    %c0_i32_1 = arith.constant 0 : i32
    return %arg0, %c0_i32, %c0_i32_0 : i32, i32, i32
  }
  func.func @transform_4(%arg0: i32) -> (i32, i32, i32) {
    %c0_i32 = arith.constant 0 : i32
    %c0_i32_0 = arith.constant 0 : i32
    %c0_i32_1 = arith.constant 0 : i32
    return %arg0, %c0_i32, %c0_i32_0 : i32, i32, i32
  }
  func.func @transform_5(%arg0: i32) -> (i32, i32, i32) {
    %c0_i32 = arith.constant 0 : i32
    %c0_i32_0 = arith.constant 0 : i32
    %c0_i32_1 = arith.constant 0 : i32
    return %arg0, %c0_i32, %c0_i32_0 : i32, i32, i32
  }
  func.func @transform_6(%arg0: i32) -> (i32, i32, i32) {
    %c0_i32 = arith.constant 0 : i32
    %c0_i32_0 = arith.constant 0 : i32
    %c0_i32_1 = arith.constant 0 : i32
    return %arg0, %c0_i32, %c0_i32_0 : i32, i32, i32
  }
}

module attributes {stable_mosaic.version = 11 : i64} {
  func.func @_kernel_p(%arg0: i32, %arg1: memref<128x128xbf16, #tpu.memory_space<vmem>>, %arg2: memref<128x128xbf16, #tpu.memory_space<vmem>>, %arg3: memref<1x128x128xbf16, #tpu.memory_space<vmem>>, %arg4: memref<1x1x128xf32, #tpu.memory_space<vmem>>, %arg5: memref<1x1x128xf32, #tpu.memory_space<vmem>>, %arg6: memref<1x1x128xf32, #tpu.memory_space<vmem>>, %arg7: memref<1x128x128xf32, #tpu.memory_space<vmem>>, %arg8: memref<128x128xbf16, #tpu.memory_space<vmem>>) attributes {dimension_semantics = [#tpu.dimension_semantics<arbitrary>], iteration_bounds = array<i64: 2>, scalar_prefetch = 0 : i64, scratch_operands = 1 : i64, tpu.core_type = #tpu.core_type<tc>, window_params = [{pipeline_mode = #tpu.pipeline_mode<synchronous>, transform_indices = @transform_0, window_bounds = array<i64: 128, 128>}, {pipeline_mode = #tpu.pipeline_mode<synchronous>, transform_indices = @transform_1, window_bounds = array<i64: 128, 128>}, {transform_indices = @transform_2, window_bounds = array<i64: 1, 128, 128>}, {transform_indices = @transform_3, window_bounds = array<i64: 1, 1, 128>}, {transform_indices = @transform_4, window_bounds = array<i64: 1, 1, 128>}, {transform_indices = @transform_5, window_bounds = array<i64: 1, 1, 128>}, {transform_indices = @transform_6, window_bounds = array<i64: 1, 128, 128>}]} {
    %c0_i32 = arith.constant 0 : i32
    %0 = arith.cmpi eq, %arg0, %c0_i32 : i32
    %1 = arith.extui %0 : i1 to i32
    %c0_i32_0 = arith.constant 0 : i32
    %2 = arith.cmpi ne, %1, %c0_i32_0 : i32
    scf.if %2 {
      %c0_27 = arith.constant 0 : index
      %c0_28 = arith.constant 0 : index
      %48 = vector.load %arg2[%c0_27, %c0_28] : memref<128x128xbf16, #tpu.memory_space<vmem>>, vector<128x128xbf16>
      %c0_29 = arith.constant 0 : index
      %c0_30 = arith.constant 0 : index
      %49 = vector.load %arg8[%c0_29, %c0_30] : memref<128x128xbf16, #tpu.memory_space<vmem>>, vector<128x128xbf16>
      tpu.vector_store %arg8[%c0_29, %c0_30], %48 {strides = array<i32>} : memref<128x128xbf16, #tpu.memory_space<vmem>>, vector<128x128xbf16>,
    } else {
    }
    %c0 = arith.constant 0 : index
    %c0_1 = arith.constant 0 : index
    %3 = vector.load %arg8[%c0, %c0_1] : memref<128x128xbf16, #tpu.memory_space<vmem>>, vector<128x128xbf16>
    %c0_2 = arith.constant 0 : index
    %c0_3 = arith.constant 0 : index
    %c0_4 = arith.constant 0 : index
    %4 = vector.load %arg3[%c0_2, %c0_3, %c0_4] : memref<1x128x128xbf16, #tpu.memory_space<vmem>>, vector<1x128x128xbf16>
    %5 = vector.shape_cast %4 : vector<1x128x128xbf16> to vector<128x128xbf16>
    %c0_5 = arith.constant 0 : index
    %c0_6 = arith.constant 0 : index
    %c0_7 = arith.constant 0 : index
    %6 = vector.load %arg4[%c0_5, %c0_6, %c0_7] : memref<1x1x128xf32, #tpu.memory_space<vmem>>, vector<1x1x128xf32>
    %7 = vector.shape_cast %6 : vector<1x1x128xf32> to vector<1x128xf32>
    %c0_8 = arith.constant 0 : index
    %c0_9 = arith.constant 0 : index
    %c0_10 = arith.constant 0 : index
    %8 = vector.load %arg5[%c0_8, %c0_9, %c0_10] : memref<1x1x128xf32, #tpu.memory_space<vmem>>, vector<1x1x128xf32>
    %9 = vector.shape_cast %8 : vector<1x1x128xf32> to vector<1x128xf32>
    %c0_11 = arith.constant 0 : index
    %c0_12 = arith.constant 0 : index
    %c0_13 = arith.constant 0 : index
    %10 = vector.load %arg6[%c0_11, %c0_12, %c0_13] : memref<1x1x128xf32, #tpu.memory_space<vmem>>, vector<1x1x128xf32>
    %11 = vector.shape_cast %10 : vector<1x1x128xf32> to vector<1x128xf32>
    %cst = arith.constant dense<0.000000e+00> : vector<128x128xf32>
    %12 = tpu.matmul %3, %5, %cst {dimension_numbers = #tpu.dot_dimension_numbers<[1], [0], [0], [1], [0, 0, 1, 1], [], []>} : vector<128x128xbf16>, vector<128x128xbf16>, vector<128x128xf32> -> vector<128x128xf32>
    %13 = arith.truncf %12 : vector<128x128xf32> to vector<128x128xbf16>
    %c0_14 = arith.constant 0 : index
    %c0_15 = arith.constant 0 : index
    %14 = vector.load %arg1[%c0_14, %c0_15] : memref<128x128xbf16, #tpu.memory_space<vmem>>, vector<128x128xbf16>
    %cst_16 = arith.constant dense<0.000000e+00> : vector<128x128xf32>
    %15 = tpu.matmul %14, %13, %cst_16 {dimension_numbers = #tpu.dot_dimension_numbers<[1], [0], [0], [1], [0, 0, 1, 1], [], []>} : vector<128x128xbf16>, vector<128x128xbf16>, vector<128x128xf32> -> vector<128x128xf32>
    %16 = vector.broadcast %7 : vector<1x128xf32> to vector<128x128xf32>
    %17 = arith.addf %15, %16 : vector<128x128xf32>
    %18 = math.tanh %17 : vector<128x128xf32>
    %19 = tpu.iota {dimensions = array<i32: 0>} : vector<128x128xi32>
    %c32_i32 = arith.constant 32 : i32
    %20 = vector.broadcast %c32_i32 : i32 to vector<128x128xi32>
    %21 = arith.cmpi slt, %19, %20 : vector<128x128xi32>
    %cst_17 = arith.constant 3.125000e-02 : f32
    %cst_18 = arith.constant 0.000000e+00 : f32
    %22 = vector.broadcast %cst_17 : f32 to vector<128x128xf32>
    %23 = vector.broadcast %cst_18 : f32 to vector<128x128xf32>
    %24 = arith.select %21, %22, %23 : vector<128x128xi1>, vector<128x128xf32>
    %25 = arith.mulf %18, %24 : vector<128x128xf32>
    %cst_19 = arith.constant dense<0.000000e+00> : vector<128xf32>
    %26 = vector.multi_reduction <add>, %25, %cst_19 [0] : vector<128x128xf32> to vector<128xf32>
    %27 = vector.shape_cast %26 : vector<128xf32> to vector<1x128xf32>
    %28 = vector.broadcast %27 : vector<1x128xf32> to vector<128x128xf32>
    %29 = arith.subf %18, %28 : vector<128x128xf32>
    %30 = arith.mulf %29, %29 : vector<128x128xf32>
    %31 = arith.mulf %30, %24 : vector<128x128xf32>
    %cst_20 = arith.constant dense<0.000000e+00> : vector<128xf32>
    %32 = vector.multi_reduction <add>, %31, %cst_20 [0] : vector<128x128xf32> to vector<128xf32>
    %33 = vector.shape_cast %32 : vector<128xf32> to vector<1x128xf32>
    %cst_21 = arith.constant 9.99999974E-6 : f32
    %34 = vector.broadcast %cst_21 : f32 to vector<1x128xf32>
    %35 = arith.addf %33, %34 : vector<1x128xf32>
    %36 = math.rsqrt %35 : vector<1x128xf32>
    %37 = vector.broadcast %36 : vector<1x128xf32> to vector<128x128xf32>
    %38 = arith.mulf %29, %37 : vector<128x128xf32>
    %39 = vector.broadcast %9 : vector<1x128xf32> to vector<128x128xf32>
    %40 = arith.mulf %38, %39 : vector<128x128xf32>
    %41 = vector.broadcast %11 : vector<1x128xf32> to vector<128x128xf32>
    %42 = arith.addf %40, %41 : vector<128x128xf32>
    %43 = arith.truncf %42 : vector<128x128xf32> to vector<128x128xbf16>
    %c0_22 = arith.constant 0 : index
    %c0_23 = arith.constant 0 : index
    %44 = vector.load %arg8[%c0_22, %c0_23] : memref<128x128xbf16, #tpu.memory_space<vmem>>, vector<128x128xbf16>
    tpu.vector_store %arg8[%c0_22, %c0_23], %43 {strides = array<i32>} : memref<128x128xbf16, #tpu.memory_space<vmem>>, vector<128x128xbf16>,
    %c0_24 = arith.constant 0 : index
    %c0_25 = arith.constant 0 : index
    %c0_26 = arith.constant 0 : index
    %45 = vector.load %arg7[%c0_24, %c0_25, %c0_26] : memref<1x128x128xf32, #tpu.memory_space<vmem>>, vector<1x128x128xf32>
    %46 = vector.shape_cast %45 : vector<1x128x128xf32> to vector<128x128xf32>
    %47 = vector.shape_cast %42 : vector<128x128xf32> to vector<1x128x128xf32>
    tpu.vector_store %arg7[%c0_24, %c0_25, %c0_26], %47 {strides = array<i32>} : memref<1x128x128xf32, #tpu.memory_space<vmem>>, vector<1x128x128xf32>,
    return
  }
  func.func @transform_0(%arg0: i32) -> (i32, i32) {
    %c0_i32 = arith.constant 0 : i32
    %c0_i32_0 = arith.constant 0 : i32
    %c0_i32_1 = arith.constant 0 : i32
    return %c0_i32, %c0_i32_0 : i32, i32
  }
  func.func @transform_1(%arg0: i32) -> (i32, i32) {
    %c0_i32 = arith.constant 0 : i32
    %c0_i32_0 = arith.constant 0 : i32
    %c0_i32_1 = arith.constant 0 : i32
    return %c0_i32, %c0_i32_0 : i32, i32
  }
  func.func @transform_2(%arg0: i32) -> (i32, i32, i32) {
    %c0_i32 = arith.constant 0 : i32
    %c0_i32_0 = arith.constant 0 : i32
    %c0_i32_1 = arith.constant 0 : i32
    return %arg0, %c0_i32, %c0_i32_0 : i32, i32, i32
  }
  func.func @transform_3(%arg0: i32) -> (i32, i32, i32) {
    %c0_i32 = arith.constant 0 : i32
    %c0_i32_0 = arith.constant 0 : i32
    %c0_i32_1 = arith.constant 0 : i32
    return %arg0, %c0_i32, %c0_i32_0 : i32, i32, i32
  }
  func.func @transform_4(%arg0: i32) -> (i32, i32, i32) {
    %c0_i32 = arith.constant 0 : i32
    %c0_i32_0 = arith.constant 0 : i32
    %c0_i32_1 = arith.constant 0 : i32
    return %arg0, %c0_i32, %c0_i32_0 : i32, i32, i32
  }
  func.func @transform_5(%arg0: i32) -> (i32, i32, i32) {
    %c0_i32 = arith.constant 0 : i32
    %c0_i32_0 = arith.constant 0 : i32
    %c0_i32_1 = arith.constant 0 : i32
    return %arg0, %c0_i32, %c0_i32_0 : i32, i32, i32
  }
  func.func @transform_6(%arg0: i32) -> (i32, i32, i32) {
    %c0_i32 = arith.constant 0 : i32
    %c0_i32_0 = arith.constant 0 : i32
    %c0_i32_1 = arith.constant 0 : i32
    return %arg0, %c0_i32, %c0_i32_0 : i32, i32, i32
  }
}

</mosaic_0001>

<llo_original>
// kernel: tpu_custom_call.1
$region0: #{tpu_custom_call.1}
  #allocation0 [shape = 'u32[]', space=smem, size = 0x4, offset = 0x4, fixed_abs, tag = 'smem constant byte address 0x4 - core index']
  #allocation1 [shape = 'u32[72,128]{1,0:T(1,128)}', space=vmem, size = 0x9000, scoped, tag = 'internal scratch']
  #allocation2 [shape = 'bf16[128,128]{1,0:T(8,128)(2,1)}', space=vmem, size = 0x8000, scoped, tag = 'scratch operand']
  %s0 = inlined_call_operand.hbm [shape: bf16[128,128], index: 0, kind: input, shape index: {}]
  %s1 = inlined_call_operand.hbm [shape: bf16[128,128], index: 1, kind: input, shape index: {}]
  %s2 = inlined_call_operand.hbm [shape: bf16[2,128,128], index: 2, kind: input, shape index: {}]
  %s3 = inlined_call_operand.vmem [shape: f32[2,1,128], index: 3, kind: input, shape index: {}]
  %s4 = inlined_call_operand.hbm [shape: f32[2,1,128], index: 4, kind: input, shape index: {}]
  %s5 = inlined_call_operand.vmem [shape: f32[2,1,128], index: 5, kind: input, shape index: {}]
  %s6 = inlined_call_operand.hbm [shape: f32[2,128,128], index: 6, kind: output, shape index: {}]
  %s7 = sld [smem:[#allocation0]]
  $region77: #{tpu_custom_call.1} parent=0
    _
  %s9 = ssub.s32 1, %s7
  %s10 = scalar_select 0, %s9, %s7
  $region1: #{tpu_custom_call.1} parent=0
    #allocation3 [shape = 'u8[32768]{0}', space=vmem, size = 0x8000, scoped, tag = 'input window, operand 0, single buffered']
    #allocation4 [shape = 's32[2]{0}', space=sflag, size = 0x8, scoped, tag = 'scoped memory for tpu_custom_call.1']
    #allocation5 [shape = 's32[2]{0}', space=sflag, size = 0x8, scoped, tag = 'scoped memory for tpu_custom_call.1']
    #allocation6 [shape = 'u8[32768]{0}', space=vmem, size = 0x8000, scoped, tag = 'input window, operand 1, single buffered']
    #allocation7 [shape = 's32[1]{0}', space=sflag, size = 0x4, scoped, tag = 'scoped memory for tpu_custom_call.1']
    #allocation8 [shape = 'u8[65536]{0}', space=vmem, size = 0x10000, scoped, tag = 'input window, operand 2']
    #allocation9 [shape = 'u8[1024]{0}', space=vmem, size = 0x400, scoped, tag = 'input window, operand 4']
    #allocation10 [shape = 'u8[131072]{0}', space=vmem, size = 0x20000, scoped, tag = 'output window, operand 0']
    %11 = vsyncpa [#allocation4], 0
    %12 = vsyncpa [#allocation7], 0
    %13 = vsyncpa [#allocation5], 0
    %s14 = scalar_lea.sflag [#allocation5], 1
    %15 = vsyncpa %s14, 0
    loop: start=0, step=1, limit=4
    $region2: #{tpu_custom_call.1} parent=1 // loop_pre_header
      _
    $region3: #{tpu_custom_call.1} parent=1 // loop_header
      %s17 = sphi 0, %s21
      %p18 = scmp.ge.s32.totalorder %s17, 4
      %s25 = sphi 0, %s25
      %s27 = sphi 0, %s25
      %s28 = sphi 0, %s27
      %s42 = sphi 0, %s28
      %s46 = sphi 0, %s46
      %s48 = sphi 0, %s46
      %s49 = sphi 0, %s48
      %s63 = sphi 0, %s49
      %s69 = sphi 0, %s71
      %s72 = sphi 0, %s69
      %s73 = sphi 0, %s72
      %s89 = sphi 0, %s73
      %s95 = sphi 0, %s97
      %s98 = sphi 0, %s95
      %s99 = sphi 0, %s98
      %s115 = sphi 0, %s99
      %s121 = sphi 0, %s123
      %s124 = sphi 0, %s121
      %s125 = sphi 0, %s124
      %s141 = sphi 0, %s125
      %s147 = sphi 0, %s149
      %s150 = sphi 0, %s147
      %s151 = sphi 0, %s150
      %s167 = sphi 0, %s151
      %s173 = sphi 0, %s175
      %s176 = sphi 0, %s173
      %s177 = sphi 0, %s176
      %s193 = sphi 0, %s177
    $region4: #{tpu_custom_call.1} parent=1 // loop_header_branch
      %20 = sbr.rel (%p18) target = $region8
    $region5: #{tpu_custom_call.1} parent=1 // loop_body
      %s22 = ssub.s32 %s17, 1
      %s23 = ssub.s32 %s17, 2
      %s24 = sadd.s32 %s17, 1
      %s26 = sadd.s32 %s25, 1
      %p29 = scmp.eq.s32.totalorder %s17, 1
      %p30 = scmp.ne.s32.totalorder %s25, %s27
      %p31 = scmp.eq.s32.totalorder %s17, 0
      %p32 = por %p30, %p31
      %p33 = scmp.ne.s32.totalorder %s25, %s27
      %p34 = scmp.eq.s32.totalorder %s22, 1
      %p35 = por %p33, %p34
      %p36 = scmp.ne.s32.totalorder %s27, %s28
      %p37 = scmp.eq.s32.totalorder %s22, 0
      %p38 = por %p36, %p37
      %p39 = scmp.ne.s32.totalorder %s27, %s28
      %p40 = scmp.eq.s32.totalorder %s23, 1
      %p41 = por %p39, %p40
      %p43 = scmp.ne.s32.totalorder %s28, %s42
      %p44 = scmp.eq.s32.totalorder %s23, 0
      %p45 = por %p43, %p44
      %s47 = sadd.s32 %s46, 1
      %p50 = scmp.eq.s32.totalorder %s17, 1
      %p51 = scmp.ne.s32.totalorder %s46, %s48
      %p52 = scmp.eq.s32.totalorder %s17, 0
      %p53 = por %p51, %p52
      %p54 = scmp.ne.s32.totalorder %s46, %s48
      %p55 = scmp.eq.s32.totalorder %s22, 1
      %p56 = por %p54, %p55
      %p57 = scmp.ne.s32.totalorder %s48, %s49
      %p58 = scmp.eq.s32.totalorder %s22, 0
      %p59 = por %p57, %p58
      %p60 = scmp.ne.s32.totalorder %s48, %s49
      %p61 = scmp.eq.s32.totalorder %s23, 1
      %p62 = por %p60, %p61
      %p64 = scmp.ne.s32.totalorder %s49, %s63
      %p65 = scmp.eq.s32.totalorder %s23, 0
      %p66 = por %p64, %p65
      %s67 = ssub.s32 %s17, %s24
      %p68 = scmp.eq.s32.totalorder %s67, 0
      %s70 = sadd.s32 %s69, 1
      %s71 = scalar_select %p68, %s69, %s70
      %p74 = pneg %p68
      %p75 = scmp.eq.s32.totalorder %s17, 1
      %p76 = por %p74, %p75
      %p77 = scmp.ne.s32.totalorder %s69, %s72
      %p78 = scmp.eq.s32.totalorder %s17, 0
      %p79 = por %p77, %p78
      %p80 = scmp.ne.s32.totalorder %s69, %s72
      %p81 = scmp.eq.s32.totalorder %s22, 1
      %p82 = por %p80, %p81
      %p83 = scmp.ne.s32.totalorder %s72, %s73
      %p84 = scmp.eq.s32.totalorder %s22, 0
      %p85 = por %p83, %p84
      %p86 = scmp.ne.s32.totalorder %s72, %s73
      %p87 = scmp.eq.s32.totalorder %s23, 1
      %p88 = por %p86, %p87
      %p90 = scmp.ne.s32.totalorder %s73, %s89
      %p91 = scmp.eq.s32.totalorder %s23, 0
      %p92 = por %p90, %p91
      %s93 = ssub.s32 %s17, %s24
      %p94 = scmp.eq.s32.totalorder %s93, 0
      %s96 = sadd.s32 %s95, 1
      %s97 = scalar_select %p94, %s95, %s96
      %p100 = pneg %p94
      %p101 = scmp.eq.s32.totalorder %s17, 1
      %p102 = por %p100, %p101
      %p103 = scmp.ne.s32.totalorder %s95, %s98
      %p104 = scmp.eq.s32.totalorder %s17, 0
      %p105 = por %p103, %p104
      %p106 = scmp.ne.s32.totalorder %s95, %s98
      %p107 = scmp.eq.s32.totalorder %s22, 1
      %p108 = por %p106, %p107
      %p109 = scmp.ne.s32.totalorder %s98, %s99
      %p110 = scmp.eq.s32.totalorder %s22, 0
      %p111 = por %p109, %p110
      %p112 = scmp.ne.s32.totalorder %s98, %s99
      %p113 = scmp.eq.s32.totalorder %s23, 1
      %p114 = por %p112, %p113
      %p116 = scmp.ne.s32.totalorder %s99, %s115
      %p117 = scmp.eq.s32.totalorder %s23, 0
      %p118 = por %p116, %p117
      %s119 = ssub.s32 %s17, %s24
      %p120 = scmp.eq.s32.totalorder %s119, 0
      %s122 = sadd.s32 %s121, 1
      %s123 = scalar_select %p120, %s121, %s122
      %p126 = pneg %p120
      %p127 = scmp.eq.s32.totalorder %s17, 1
      %p128 = por %p126, %p127
      %p129 = scmp.ne.s32.totalorder %s121, %s124
      %p130 = scmp.eq.s32.totalorder %s17, 0
      %p131 = por %p129, %p130
      %p132 = scmp.ne.s32.totalorder %s121, %s124
      %p133 = scmp.eq.s32.totalorder %s22, 1
      %p134 = por %p132, %p133
      %p135 = scmp.ne.s32.totalorder %s124, %s125
      %p136 = scmp.eq.s32.totalorder %s22, 0
      %p137 = por %p135, %p136
      %p138 = scmp.ne.s32.totalorder %s124, %s125
      %p139 = scmp.eq.s32.totalorder %s23, 1
      %p140 = por %p138, %p139
      %p142 = scmp.ne.s32.totalorder %s125, %s141
      %p143 = scmp.eq.s32.totalorder %s23, 0
      %p144 = por %p142, %p143
      %s145 = ssub.s32 %s17, %s24
      %p146 = scmp.eq.s32.totalorder %s145, 0
      %s148 = sadd.s32 %s147, 1
      %s149 = scalar_select %p146, %s147, %s148
      %p152 = pneg %p146
      %p153 = scmp.eq.s32.totalorder %s17, 1
      %p154 = por %p152, %p153
      %p155 = scmp.ne.s32.totalorder %s147, %s150
      %p156 = scmp.eq.s32.totalorder %s17, 0
      %p157 = por %p155, %p156
      %p158 = scmp.ne.s32.totalorder %s147, %s150
      %p159 = scmp.eq.s32.totalorder %s22, 1
      %p160 = por %p158, %p159
      %p161 = scmp.ne.s32.totalorder %s150, %s151
      %p162 = scmp.eq.s32.totalorder %s22, 0
      %p163 = por %p161, %p162
      %p164 = scmp.ne.s32.totalorder %s150, %s151
      %p165 = scmp.eq.s32.totalorder %s23, 1
      %p166 = por %p164, %p165
      %p168 = scmp.ne.s32.totalorder %s151, %s167
      %p169 = scmp.eq.s32.totalorder %s23, 0
      %p170 = por %p168, %p169
      %s171 = ssub.s32 %s17, %s24
      %p172 = scmp.eq.s32.totalorder %s171, 0
      %s174 = sadd.s32 %s173, 1
      %s175 = scalar_select %p172, %s173, %s174
      %p178 = pneg %p172
      %p179 = scmp.eq.s32.totalorder %s17, 1
      %p180 = por %p178, %p179
      %p181 = scmp.ne.s32.totalorder %s173, %s176
      %p182 = scmp.eq.s32.totalorder %s17, 0
      %p183 = por %p181, %p182
      %p184 = scmp.ne.s32.totalorder %s173, %s176
      %p185 = scmp.eq.s32.totalorder %s22, 1
      %p186 = por %p184, %p185
      %p187 = scmp.ne.s32.totalorder %s176, %s177
      %p188 = scmp.eq.s32.totalorder %s22, 0
      %p189 = por %p187, %p188
      %p190 = scmp.ne.s32.totalorder %s176, %s177
      %p191 = scmp.eq.s32.totalorder %s23, 1
      %p192 = por %p190, %p191
      %p194 = scmp.ne.s32.totalorder %s177, %s193
      %p195 = scmp.eq.s32.totalorder %s23, 0
      %p196 = por %p194, %p195
      %p197 = scmp.le.s32.totalorder 1, %s17
      %p198 = scmp.lt.s32.totalorder %s17, 3
      %p199 = pnand %p197, %p198
      %p200 = pneg %p199
      // Predicated region
      $region9: #{tpu_custom_call.1} parent=5 // pred_check
        _
      $region10: #{tpu_custom_call.1} parent=5 // pred_check_branch
        %202 = sbr.rel (%p199) target = $region12
      $region11: #{tpu_custom_call.1} parent=5 // pred_region
        %s203 = ssub.s32 %s17, 1
        // Predicated region
        $region13: #{tpu_custom_call.1} parent=11 // pred_check
          %p204 = pneg %p38
        $region14: #{tpu_custom_call.1} parent=11 // pred_check_branch
          %206 = sbr.rel (%p204) target = $region16
        $region15: #{tpu_custom_call.1} parent=11 // pred_region
          %208 = vsyncadd [#allocation4], 0
          %s209 = sshll.u32 %s0, 4
          %s210 = int_to_ptr.hbm [resolvable:$true] %s209
          %s211 = sshll.u32 [#allocation3], 4
          %s212 = int_to_ptr.vmem [resolvable:$true] %s211
          %217 = dma.hbm_to_vmem [thread:$0]  %s210, 1024, %s212, [#allocation4], 64, 64, 4
        $region16: #{tpu_custom_call.1} parent=11 // pred_fallthru
          _
        // Predicated region
        $region17: #{tpu_custom_call.1} parent=11 // pred_check
          %p218 = pneg %p59
        $region18: #{tpu_custom_call.1} parent=11 // pred_check_branch
          %220 = sbr.rel (%p218) target = $region20
        $region19: #{tpu_custom_call.1} parent=11 // pred_region
          %222 = vsyncadd [#allocation7], 0
          %s223 = sshll.u32 %s1, 4
          %s224 = int_to_ptr.hbm [resolvable:$true] %s223
          %s225 = sshll.u32 [#allocation6], 4
          %s226 = int_to_ptr.vmem [resolvable:$true] %s225
          %231 = dma.hbm_to_vmem [thread:$0]  %s224, 1024, %s226, [#allocation7], 64, 64, 4
        $region20: #{tpu_custom_call.1} parent=11 // pred_fallthru
          _
      $region12: #{tpu_custom_call.1} parent=5 // pred_fallthru
        _
      %p232 = scmp.lt.s32.totalorder %s17, 2
      // Predicated region
      $region21: #{tpu_custom_call.1} parent=5 // pred_check
        %p233 = pneg %p232
      $region22: #{tpu_custom_call.1} parent=5 // pred_check_branch
        %235 = sbr.rel (%p233) target = $region24
      $region23: #{tpu_custom_call.1} parent=5 // pred_region
        // Predicated region
        $region25: #{tpu_custom_call.1} parent=23 // pred_check
          %p236 = pneg %p79
        $region26: #{tpu_custom_call.1} parent=23 // pred_check_branch
          %238 = sbr.rel (%p236) target = $region28
        $region27: #{tpu_custom_call.1} parent=23 // pred_region
          %s239 = sand.u32 %s17, 1
          %s240 = scalar_lea.sflag [#allocation4], %s239
          %s241 = sand.u32 %s69, 1
          %s242 = smul.addr %s241, 64
          %s243 = scalar_lea.vmem [#allocation8], %s242
          %245 = vsyncadd %s240, 0
          %s246 = smul.addr %s17, 16
          %s247 = smul.addr %s246, 4
          %s248 = scalar_lea.hbm %s2, %s247
          %s249 = sshll.u32 %s248, 4
          %s250 = int_to_ptr.hbm [resolvable:$true] %s249
          %s251 = sshll.u32 %s243, 4
          %s252 = int_to_ptr.vmem [resolvable:$true] %s251
          %257 = dma.hbm_to_vmem [thread:$0]  %s250, 1024, %s252, %s240, 64, 64, 4
        $region28: #{tpu_custom_call.1} parent=23 // pred_fallthru
          _
        // Predicated region
        $region29: #{tpu_custom_call.1} parent=23 // pred_check
          %p258 = pneg %p105
        $region30: #{tpu_custom_call.1} parent=23 // pred_check_branch
          %260 = sbr.rel (%p258) target = $region32
        $region31: #{tpu_custom_call.1} parent=23 // pred_region
          %p261 = scmp.lt.s32.totalorder %s17, 1
          %s262 = scalar_select %p261, %s17, 1
          %s263 = scalar_lea.vmem %s3, %s262
        $region32: #{tpu_custom_call.1} parent=23 // pred_fallthru
          _
        // Predicated region
        $region33: #{tpu_custom_call.1} parent=23 // pred_check
          %p264 = pneg %p131
        $region34: #{tpu_custom_call.1} parent=23 // pred_check_branch
          %266 = sbr.rel (%p264) target = $region36
        $region35: #{tpu_custom_call.1} parent=23 // pred_region
          %s267 = sand.u32 %s17, 1
          %s268 = scalar_lea.sflag [#allocation4], %s267
          %s269 = sand.u32 %s121, 1
          %s270 = scalar_lea.vmem [#allocation9], %s269
          %272 = vsyncadd %s268, 0
          %s273 = scalar_lea.hbm %s4, %s17
          %s275 = sshll.u32 %s273, 4
          %s276 = int_to_ptr.hbm [resolvable:$true] %s275
          %s277 = sshll.u32 %s270, 4
          %s278 = int_to_ptr.vmem [resolvable:$true] %s277
          %280 = dma.hbm_to_vmem [thread:$0]  %s276, 16, %s278, %s268
        $region36: #{tpu_custom_call.1} parent=23 // pred_fallthru
          _
        // Predicated region
        $region37: #{tpu_custom_call.1} parent=23 // pred_check
          %p281 = pneg %p157
        $region38: #{tpu_custom_call.1} parent=23 // pred_check_branch
          %283 = sbr.rel (%p281) target = $region40
        $region39: #{tpu_custom_call.1} parent=23 // pred_region
          %p284 = scmp.lt.s32.totalorder %s17, 1
          %s285 = scalar_select %p284, %s17, 1
          %s286 = scalar_lea.vmem %s5, %s285
        $region40: #{tpu_custom_call.1} parent=23 // pred_fallthru
          _
      $region24: #{tpu_custom_call.1} parent=5 // pred_fallthru
        _
      %p287 = scmp.le.s32.totalorder 1, %s17
      %p288 = scmp.lt.s32.totalorder %s17, 3
      %p289 = pnand %p287, %p288
      %p290 = pneg %p289
      // Predicated region
      $region41: #{tpu_custom_call.1} parent=5 // pred_check
        _
      $region42: #{tpu_custom_call.1} parent=5 // pred_check_branch
        %292 = sbr.rel (%p289) target = $region44
      $region43: #{tpu_custom_call.1} parent=5 // pred_region
        %s293 = ssub.s32 %s17, 1
        // Predicated region
        $region45: #{tpu_custom_call.1} parent=43 // pred_check
          %p294 = pneg %p38
        $region46: #{tpu_custom_call.1} parent=43 // pred_check_branch
          %296 = sbr.rel (%p294) target = $region48
        $region47: #{tpu_custom_call.1} parent=43 // pred_region
          %298 = dma.done [#allocation4], 1024
        $region48: #{tpu_custom_call.1} parent=43 // pred_fallthru
          _
        // Predicated region
        $region49: #{tpu_custom_call.1} parent=43 // pred_check
          %p299 = pneg %p59
        $region50: #{tpu_custom_call.1} parent=43 // pred_check_branch
          %301 = sbr.rel (%p299) target = $region52
        $region51: #{tpu_custom_call.1} parent=43 // pred_region
          %303 = dma.done [#allocation7], 1024
        $region52: #{tpu_custom_call.1} parent=43 // pred_fallthru
          _
        %s304 = sand.u32 %s22, 1
        %s305 = scalar_lea.sflag [#allocation4], %s304
        %s306 = sand.u32 %s72, 1
        %s307 = smul.addr %s306, 64
        %s308 = scalar_lea.vmem [#allocation8], %s307
        // Predicated region
        $region53: #{tpu_custom_call.1} parent=43 // pred_check
          %p309 = pneg %p85
        $region54: #{tpu_custom_call.1} parent=43 // pred_check_branch
          %311 = sbr.rel (%p309) target = $region56
        $region55: #{tpu_custom_call.1} parent=43 // pred_region
          %313 = dma.done %s305, 1024
        $region56: #{tpu_custom_call.1} parent=43 // pred_fallthru
          _
        %s314 = sand.u32 %s22, 1
        %s315 = scalar_lea.sflag [#allocation4], %s314
        %s316 = sand.u32 %s124, 1
        %s317 = scalar_lea.vmem [#allocation9], %s316
        // Predicated region
        $region57: #{tpu_custom_call.1} parent=43 // pred_check
          %p318 = pneg %p137
        $region58: #{tpu_custom_call.1} parent=43 // pred_check_branch
          %320 = sbr.rel (%p318) target = $region60
        $region59: #{tpu_custom_call.1} parent=43 // pred_region
          %322 = dma.done %s315, 16
        $region60: #{tpu_custom_call.1} parent=43 // pred_fallthru
          _
        %p323 = pneg %p38
        %p324 = pneg %p35
        %p325 = pneg %p59
        %p326 = pneg %p56
        %s327 = sand.u32 %s22, 1
        %s328 = scalar_lea.sflag [#allocation4], %s327
        %s329 = sand.u32 %s72, 1
        %s330 = smul.addr %s329, 64
        %s331 = scalar_lea.vmem [#allocation8], %s330
        %p332 = pneg %p85
        %p333 = pneg %p82
        %p334 = scmp.lt.s32.totalorder %s22, 1
        %s335 = scalar_select %p334, %s22, 1
        %s336 = scalar_lea.vmem %s3, %s335
        %p337 = pneg %p111
        %p338 = pneg %p108
        %s339 = sand.u32 %s22, 1
        %s340 = scalar_lea.sflag [#allocation4], %s339
        %s341 = sand.u32 %s124, 1
        %s342 = scalar_lea.vmem [#allocation9], %s341
        %p343 = pneg %p137
        %p344 = pneg %p134
        %p345 = scmp.lt.s32.totalorder %s22, 1
        %s346 = scalar_select %p345, %s22, 1
        %s347 = scalar_lea.vmem %s5, %s346
        %p348 = pneg %p163
        %p349 = pneg %p160
        %p350 = pneg %p189
        %p351 = pneg %p186
        %s352 = sand.u32 %s176, 1
        %s353 = scalar_lea.sflag [#allocation5], %s352
        %s354 = sand.u32 %s176, 1
        %s355 = smul.addr %s354, 128
        %s356 = scalar_lea.vmem [#allocation10], %s355
        %p357 = scmp.lt.s32.totalorder %s22, 1
        %s358 = scalar_select %p357, %s22, 1
        %s359 = scalar_lea.vmem %s3, %s358
        %p360 = scmp.lt.s32.totalorder %s22, 1
        %s361 = scalar_select %p360, %s22, 1
        %s362 = scalar_lea.vmem %s5, %s361
        %p363 = scmp.eq.s32.totalorder %s22, 0
        // Predicated region
        $region61: #{tpu_custom_call.1} parent=43 // pred_check
          %p364 = pneg %p363
        $region62: #{tpu_custom_call.1} parent=43 // pred_check_branch
          %366 = sbr.rel (%p364) target = $region64
        $region63: #{tpu_custom_call.1} parent=43 // pred_region
          %v367 = vld [vmem:[#allocation6] sm:$0xf]
          %v368 = vld [vmem:[#allocation6 + $0x4] sm:$0xf]
          %v369 = vld [vmem:[#allocation6 + $0x8] sm:$0xf]
          %v370 = vld [vmem:[#allocation6 + $0xc] sm:$0xf]
          %v371 = vld [vmem:[#allocation6 + $0x10] sm:$0xf]
          %v372 = vld [vmem:[#allocation6 + $0x14] sm:$0xf]
          %v373 = vld [vmem:[#allocation6 + $0x18] sm:$0xf]
          %v374 = vld [vmem:[#allocation6 + $0x1c] sm:$0xf]
          %v375 = vld [vmem:[#allocation6 + $0x20] sm:$0xf]
          %v376 = vld [vmem:[#allocation6 + $0x24] sm:$0xf]
          %v377 = vld [vmem:[#allocation6 + $0x28] sm:$0xf]
          %v378 = vld [vmem:[#allocation6 + $0x2c] sm:$0xf]
          %v379 = vld [vmem:[#allocation6 + $0x30] sm:$0xf]
          %v380 = vld [vmem:[#allocation6 + $0x34] sm:$0xf]
          %v381 = vld [vmem:[#allocation6 + $0x38] sm:$0xf]
          %v382 = vld [vmem:[#allocation6 + $0x3c] sm:$0xf]
          %383 = vst [vmem:[#allocation2] sm:$0xf] %v367
          %384 = vst [vmem:[#allocation2 + $0x4] sm:$0xf] %v368
          %385 = vst [vmem:[#allocation2 + $0x8] sm:$0xf] %v369
          %386 = vst [vmem:[#allocation2 + $0xc] sm:$0xf] %v370
          %387 = vst [vmem:[#allocation2 + $0x10] sm:$0xf] %v371
          %388 = vst [vmem:[#allocation2 + $0x14] sm:$0xf] %v372
          %389 = vst [vmem:[#allocation2 + $0x18] sm:$0xf] %v373
          %390 = vst [vmem:[#allocation2 + $0x1c] sm:$0xf] %v374
          %391 = vst [vmem:[#allocation2 + $0x20] sm:$0xf] %v375
          %392 = vst [vmem:[#allocation2 + $0x24] sm:$0xf] %v376
          %393 = vst [vmem:[#allocation2 + $0x28] sm:$0xf] %v377
          %394 = vst [vmem:[#allocation2 + $0x2c] sm:$0xf] %v378
          %395 = vst [vmem:[#allocation2 + $0x30] sm:$0xf] %v379
          %396 = vst [vmem:[#allocation2 + $0x34] sm:$0xf] %v380
          %397 = vst [vmem:[#allocation2 + $0x38] sm:$0xf] %v381
          %398 = vst [vmem:[#allocation2 + $0x3c] sm:$0xf] %v382
        $region64: #{tpu_custom_call.1} parent=43 // pred_fallthru
          _
        %v399 = vld [vmem:[#allocation2] sm:$0xf]
        %v400 = vld [vmem:[#allocation2 + $0x4] sm:$0xf]
        %v401 = vld [vmem:[#allocation2 + $0x8] sm:$0xf]
        %v402 = vld [vmem:[#allocation2 + $0xc] sm:$0xf]
        %v403 = vld [vmem:[#allocation2 + $0x10] sm:$0xf]
        %v404 = vld [vmem:[#allocation2 + $0x14] sm:$0xf]
        %v405 = vld [vmem:[#allocation2 + $0x18] sm:$0xf]
        %v406 = vld [vmem:[#allocation2 + $0x1c] sm:$0xf]
        %v407 = vld [vmem:[#allocation2 + $0x20] sm:$0xf]
        %v408 = vld [vmem:[#allocation2 + $0x24] sm:$0xf]
        %v409 = vld [vmem:[#allocation2 + $0x28] sm:$0xf]
        %v410 = vld [vmem:[#allocation2 + $0x2c] sm:$0xf]
        %v411 = vld [vmem:[#allocation2 + $0x30] sm:$0xf]
        %v412 = vld [vmem:[#allocation2 + $0x34] sm:$0xf]
        %v413 = vld [vmem:[#allocation2 + $0x38] sm:$0xf]
        %v414 = vld [vmem:[#allocation2 + $0x3c] sm:$0xf]
        %v415 = vld [vmem:[%s308] sm:$0xf]
        %v416 = vld [vmem:[%s308 + $0x4] sm:$0xf]
        %v417 = vld [vmem:[%s308 + $0x8] sm:$0xf]
        %v418 = vld [vmem:[%s308 + $0xc] sm:$0xf]
        %v419 = vld [vmem:[%s308 + $0x10] sm:$0xf]
        %v420 = vld [vmem:[%s308 + $0x14] sm:$0xf]
        %v421 = vld [vmem:[%s308 + $0x18] sm:$0xf]
        %v422 = vld [vmem:[%s308 + $0x1c] sm:$0xf]
        %v423 = vld [vmem:[%s308 + $0x20] sm:$0xf]
        %v424 = vld [vmem:[%s308 + $0x24] sm:$0xf]
        %v425 = vld [vmem:[%s308 + $0x28] sm:$0xf]
        %v426 = vld [vmem:[%s308 + $0x2c] sm:$0xf]
        %v427 = vld [vmem:[%s308 + $0x30] sm:$0xf]
        %v428 = vld [vmem:[%s308 + $0x34] sm:$0xf]
        %v429 = vld [vmem:[%s308 + $0x38] sm:$0xf]
        %v430 = vld [vmem:[%s308 + $0x3c] sm:$0xf]
        %v431 = vld [vmem:[%s359] sm:$0x1]
        %v432 = vld [vmem:[%s317] sm:$0x1]
        %v433 = vld [vmem:[%s362] sm:$0x1]
        %v450 = vunpack.c.l.b16 %v399
        %v451 = vunpack.c.l.b16 %v400
        %v452 = vunpack.c.l.b16 %v401
        %v453 = vunpack.c.l.b16 %v402
        %v454 = vunpack.c.l.b16 %v403
        %v455 = vunpack.c.l.b16 %v404
        %v456 = vunpack.c.l.b16 %v405
        %v457 = vunpack.c.l.b16 %v406
        %v458 = vunpack.c.l.b16 %v407
        %v459 = vunpack.c.l.b16 %v408
        %v460 = vunpack.c.l.b16 %v409
        %v461 = vunpack.c.l.b16 %v410
        %v462 = vunpack.c.l.b16 %v411
        %v463 = vunpack.c.l.b16 %v412
        %v464 = vunpack.c.l.b16 %v413
        %v465 = vunpack.c.l.b16 %v414
        %v466 = vpack.c.b16 %v451, %v450
        %v467 = vpack.c.b16 %v453, %v452
        %v468 = vpack.c.b16 %v455, %v454
        %v469 = vpack.c.b16 %v457, %v456
        %v470 = vpack.c.b16 %v459, %v458
        %v471 = vpack.c.b16 %v461, %v460
        %v472 = vpack.c.b16 %v463, %v462
        %v473 = vpack.c.b16 %v465, %v464
        %v498 = vunpack.c.l.b16 %v415
        %v499 = vunpack.c.l.b16 %v416
        %v500 = vunpack.c.l.b16 %v417
        %v501 = vunpack.c.l.b16 %v418
        %v502 = vunpack.c.l.b16 %v419
        %v503 = vunpack.c.l.b16 %v420
        %v504 = vunpack.c.l.b16 %v421
        %v505 = vunpack.c.l.b16 %v422
        %v506 = vunpack.c.l.b16 %v423
        %v507 = vunpack.c.l.b16 %v424
        %v508 = vunpack.c.l.b16 %v425
        %v509 = vunpack.c.l.b16 %v426
        %v510 = vunpack.c.l.b16 %v427
        %v511 = vunpack.c.l.b16 %v428
        %v512 = vunpack.c.l.b16 %v429
        %v513 = vunpack.c.l.b16 %v430
        %v514 = vpack.c.b16 %v499, %v498
        %v515 = vpack.c.b16 %v501, %v500
        %v516 = vpack.c.b16 %v503, %v502
        %v517 = vpack.c.b16 %v505, %v504
        %v518 = vpack.c.b16 %v507, %v506
        %v519 = vpack.c.b16 %v509, %v508
        %v520 = vpack.c.b16 %v511, %v510
        %v521 = vpack.c.b16 %v513, %v512
        %530 = vmatpush.bf16.msra.mxu0 %v521
        %531 = vmatpush.bf16.msra.mxu0 %v520
        %532 = vmatpush.bf16.msra.mxu0 %v519
        %533 = vmatpush.bf16.msra.mxu0 %v518
        %534 = vmatpush.bf16.msra.mxu0 %v517
        %535 = vmatpush.bf16.msra.mxu0 %v516
        %536 = vmatpush.bf16.msra.mxu0 %v515
        %537 = vmatpush.bf16.msra.mxu0 %v514
        %538 = vmatmul.bf16.gmra.mxu0 %v466
        %v539 = vpop.f32.mrf.mxu0
        %v540 = vadd.f32 0.0, %v539
        %v541 = vpop.f32.mrf.mxu0
        %v542 = vadd.f32 0.0, %v541
        %543 = vmatmul.bf16.gmra.mxu0 %v467
        %v544 = vpop.f32.mrf.mxu0
        %v545 = vadd.f32 0.0, %v544
        %v546 = vpop.f32.mrf.mxu0
        %v547 = vadd.f32 0.0, %v546
        %548 = vmatmul.bf16.gmra.mxu0 %v468
        %v549 = vpop.f32.mrf.mxu0
        %v550 = vadd.f32 0.0, %v549
        %v551 = vpop.f32.mrf.mxu0
        %v552 = vadd.f32 0.0, %v551
        %553 = vmatmul.bf16.gmra.mxu0 %v469
        %v554 = vpop.f32.mrf.mxu0
        %v555 = vadd.f32 0.0, %v554
        %v556 = vpop.f32.mrf.mxu0
        %v557 = vadd.f32 0.0, %v556
        %558 = vmatmul.bf16.gmra.mxu0 %v470
        %v559 = vpop.f32.mrf.mxu0
        %v560 = vadd.f32 0.0, %v559
        %v561 = vpop.f32.mrf.mxu0
        %v562 = vadd.f32 0.0, %v561
        %563 = vmatmul.bf16.gmra.mxu0 %v471
        %v564 = vpop.f32.mrf.mxu0
        %v565 = vadd.f32 0.0, %v564
        %v566 = vpop.f32.mrf.mxu0
        %v567 = vadd.f32 0.0, %v566
        %568 = vmatmul.bf16.gmra.mxu0 %v472
        %v569 = vpop.f32.mrf.mxu0
        %v570 = vadd.f32 0.0, %v569
        %v571 = vpop.f32.mrf.mxu0
        %v572 = vadd.f32 0.0, %v571
        %573 = vmatmul.bf16.gmra.mxu0 %v473
        %v574 = vpop.f32.mrf.mxu0
        %v575 = vadd.f32 0.0, %v574
        %v576 = vpop.f32.mrf.mxu0
        %v577 = vadd.f32 0.0, %v576
        %578 = vdwg.mxu0
        %v579 = vpack.c.bf16 %v542, %v540
        %v580 = vpack.c.bf16 %v547, %v545
        %v581 = vpack.c.bf16 %v552, %v550
        %v582 = vpack.c.bf16 %v557, %v555
        %v583 = vpack.c.bf16 %v562, %v560
        %v584 = vpack.c.bf16 %v567, %v565
        %v585 = vpack.c.bf16 %v572, %v570
        %v586 = vpack.c.bf16 %v577, %v575
        %v587 = vld [vmem:[#allocation3] sm:$0xf]
        %v588 = vld [vmem:[#allocation3 + $0x4] sm:$0xf]
        %v589 = vld [vmem:[#allocation3 + $0x8] sm:$0xf]
        %v590 = vld [vmem:[#allocation3 + $0xc] sm:$0xf]
        %v591 = vld [vmem:[#allocation3 + $0x10] sm:$0xf]
        %v592 = vld [vmem:[#allocation3 + $0x14] sm:$0xf]
        %v593 = vld [vmem:[#allocation3 + $0x18] sm:$0xf]
        %v594 = vld [vmem:[#allocation3 + $0x1c] sm:$0xf]
        %v595 = vld [vmem:[#allocation3 + $0x20] sm:$0xf]
        %v596 = vld [vmem:[#allocation3 + $0x24] sm:$0xf]
        %v597 = vld [vmem:[#allocation3 + $0x28] sm:$0xf]
        %v598 = vld [vmem:[#allocation3 + $0x2c] sm:$0xf]
        %v599 = vld [vmem:[#allocation3 + $0x30] sm:$0xf]
        %v600 = vld [vmem:[#allocation3 + $0x34] sm:$0xf]
        %v601 = vld [vmem:[#allocation3 + $0x38] sm:$0xf]
        %v602 = vld [vmem:[#allocation3 + $0x3c] sm:$0xf]
        %v604 = vperm.slane %v431, 0
        %v622 = vunpack.c.l.b16 %v587
        %v623 = vunpack.c.l.b16 %v588
        %v624 = vunpack.c.l.b16 %v589
        %v625 = vunpack.c.l.b16 %v590
        %v626 = vunpack.c.l.b16 %v591
        %v627 = vunpack.c.l.b16 %v592
        %v628 = vunpack.c.l.b16 %v593
        %v629 = vunpack.c.l.b16 %v594
        %v630 = vunpack.c.l.b16 %v595
        %v631 = vunpack.c.l.b16 %v596
        %v632 = vunpack.c.l.b16 %v597
        %v633 = vunpack.c.l.b16 %v598
        %v634 = vunpack.c.l.b16 %v599
        %v635 = vunpack.c.l.b16 %v600
        %v636 = vunpack.c.l.b16 %v601
        %v637 = vunpack.c.l.b16 %v602
        %v638 = vpack.c.b16 %v623, %v622
        %v639 = vpack.c.b16 %v625, %v624
        %v640 = vpack.c.b16 %v627, %v626
        %v641 = vpack.c.b16 %v629, %v628
        %v642 = vpack.c.b16 %v631, %v630
        %v643 = vpack.c.b16 %v633, %v632
        %v644 = vpack.c.b16 %v635, %v634
        %v645 = vpack.c.b16 %v637, %v636
        %654 = vmatpush.bf16.msra.mxu0 %v586
        %655 = vmatpush.bf16.msra.mxu0 %v585
        %656 = vmatpush.bf16.msra.mxu0 %v584
        %657 = vmatpush.bf16.msra.mxu0 %v583
        %658 = vmatpush.bf16.msra.mxu0 %v582
        %659 = vmatpush.bf16.msra.mxu0 %v581
        %660 = vmatpush.bf16.msra.mxu0 %v580
        %661 = vmatpush.bf16.msra.mxu0 %v579
        %662 = vmatmul.bf16.gmra.mxu0 %v638
        %v663 = vpop.f32.mrf.mxu0
        %v664 = vadd.f32 %v604, %v663
        %v665 = vpop.f32.mrf.mxu0
        %v666 = vadd.f32 %v604, %v665
        %667 = vmatmul.bf16.gmra.mxu0 %v639
        %v668 = vpop.f32.mrf.mxu0
        %v669 = vadd.f32 %v604, %v668
        %v670 = vpop.f32.mrf.mxu0
        %v671 = vadd.f32 %v604, %v670
        %672 = vmatmul.bf16.gmra.mxu0 %v640
        %v673 = vpop.f32.mrf.mxu0
        %v674 = vadd.f32 %v604, %v673
        %v675 = vpop.f32.mrf.mxu0
        %v676 = vadd.f32 %v604, %v675
        %677 = vmatmul.bf16.gmra.mxu0 %v641
        %v678 = vpop.f32.mrf.mxu0
        %v679 = vadd.f32 %v604, %v678
        %v680 = vpop.f32.mrf.mxu0
        %v681 = vadd.f32 %v604, %v680
        %682 = vmatmul.bf16.gmra.mxu0 %v642
        %v683 = vpop.f32.mrf.mxu0
        %v684 = vadd.f32 %v604, %v683
        %v685 = vpop.f32.mrf.mxu0
        %v686 = vadd.f32 %v604, %v685
        %687 = vmatmul.bf16.gmra.mxu0 %v643
        %v688 = vpop.f32.mrf.mxu0
        %v689 = vadd.f32 %v604, %v688
        %v690 = vpop.f32.mrf.mxu0
        %v691 = vadd.f32 %v604, %v690
        %692 = vmatmul.bf16.gmra.mxu0 %v644
        %v693 = vpop.f32.mrf.mxu0
        %v694 = vadd.f32 %v604, %v693
        %v695 = vpop.f32.mrf.mxu0
        %v696 = vadd.f32 %v604, %v695
        %697 = vmatmul.bf16.gmra.mxu0 %v645
        %v698 = vpop.f32.mrf.mxu0
        %v699 = vadd.f32 %v604, %v698
        %v700 = vpop.f32.mrf.mxu0
        %v701 = vadd.f32 %v604, %v700
        %702 = vdwg.mxu0
        %v703 = vtanh.pop %v664
        %v704 = vtanh.pop %v666
        %v705 = vtanh.pop %v669
        %v706 = vtanh.pop %v671
        %v707 = vtanh.pop %v674
        %v708 = vtanh.pop %v676
        %v709 = vtanh.pop %v679
        %v710 = vtanh.pop %v681
        %v711 = vtanh.pop %v684
        %v712 = vtanh.pop %v686
        %v713 = vtanh.pop %v689
        %v714 = vtanh.pop %v691
        %v715 = vtanh.pop %v694
        %v716 = vtanh.pop %v696
        %v717 = vtanh.pop %v699
        %v718 = vtanh.pop %v701
        %v719 = vlaneseq
        %v720 = vshrl.u32 %v719, 7
        %v721 = vadd.s32 %v720, 8
        %v722 = vadd.s32 %v720, 16
        %v723 = vadd.s32 %v720, 24
        %v724 = vadd.s32 %v720, 32
        %v725 = vadd.s32 %v720, 40
        %v726 = vadd.s32 %v720, 48
        %v727 = vadd.s32 %v720, 56
        %v728 = vadd.s32 %v720, 64
        %v729 = vadd.s32 %v720, 72
        %v730 = vadd.s32 %v720, 80
        %v731 = vadd.s32 %v720, 88
        %v732 = vadd.s32 %v720, 96
        %v733 = vadd.s32 %v720, 104
        %v734 = vadd.s32 %v720, 112
        %v735 = vadd.s32 %v720, 120
        %vm736 = vcmp.lt.s32.totalorder %v720, 32
        %vm737 = vcmp.lt.s32.totalorder %v721, 32
        %vm738 = vcmp.lt.s32.totalorder %v722, 32
        %vm739 = vcmp.lt.s32.totalorder %v723, 32
        %vm740 = vcmp.lt.s32.totalorder %v724, 32
        %vm741 = vcmp.lt.s32.totalorder %v725, 32
        %vm742 = vcmp.lt.s32.totalorder %v726, 32
        %vm743 = vcmp.lt.s32.totalorder %v727, 32
        %vm744 = vcmp.lt.s32.totalorder %v728, 32
        %vm745 = vcmp.lt.s32.totalorder %v729, 32
        %vm746 = vcmp.lt.s32.totalorder %v730, 32
        %vm747 = vcmp.lt.s32.totalorder %v731, 32
        %vm748 = vcmp.lt.s32.totalorder %v732, 32
        %vm749 = vcmp.lt.s32.totalorder %v733, 32
        %vm750 = vcmp.lt.s32.totalorder %v734, 32
        %vm751 = vcmp.lt.s32.totalorder %v735, 32
        %v752 = vsel %vm736, 0.03125, 0.0
        %v753 = vsel %vm737, 0.03125, 0.0
        %v754 = vsel %vm738, 0.03125, 0.0
        %v755 = vsel %vm739, 0.03125, 0.0
        %v756 = vsel %vm740, 0.03125, 0.0
        %v757 = vsel %vm741, 0.03125, 0.0
        %v758 = vsel %vm742, 0.03125, 0.0
        %v759 = vsel %vm743, 0.03125, 0.0
        %v760 = vsel %vm744, 0.03125, 0.0
        %v761 = vsel %vm745, 0.03125, 0.0
        %v762 = vsel %vm746, 0.03125, 0.0
        %v763 = vsel %vm747, 0.03125, 0.0
        %v764 = vsel %vm748, 0.03125, 0.0
        %v765 = vsel %vm749, 0.03125, 0.0
        %v766 = vsel %vm750, 0.03125, 0.0
        %v767 = vsel %vm751, 0.03125, 0.0
        %v768 = vmul.f32 %v703, %v752
        %v769 = vmul.f32 %v704, %v753
        %v770 = vmul.f32 %v705, %v754
        %v771 = vmul.f32 %v706, %v755
        %v772 = vmul.f32 %v707, %v756
        %v773 = vmul.f32 %v708, %v757
        %v774 = vmul.f32 %v709, %v758
        %v775 = vmul.f32 %v710, %v759
        %v776 = vmul.f32 %v711, %v760
        %v777 = vmul.f32 %v712, %v761
        %v778 = vmul.f32 %v713, %v762
        %v779 = vmul.f32 %v714, %v763
        %v780 = vmul.f32 %v715, %v764
        %v781 = vmul.f32 %v716, %v765
        %v782 = vmul.f32 %v717, %v766
        %v783 = vmul.f32 %v718, %v767
        %v784 = vadd.f32 %v768, %v769
        %v785 = vadd.f32 %v784, %v770
        %v786 = vadd.f32 %v785, %v771
        %v787 = vadd.f32 %v786, %v772
        %v788 = vadd.f32 %v787, %v773
        %v789 = vadd.f32 %v788, %v774
        %v790 = vadd.f32 %v789, %v775
        %v791 = vadd.f32 %v790, %v776
        %v792 = vadd.f32 %v791, %v777
        %v793 = vadd.f32 %v792, %v778
        %v794 = vadd.f32 %v793, %v779
        %v795 = vadd.f32 %v794, %v780
        %v796 = vadd.f32 %v795, %v781
        %v797 = vadd.f32 %v796, %v782
        %v798 = vadd.f32 %v797, %v783
        %v799 = vrot.slane %v798, 4
        %v800 = vadd.f32 %v798, %v799
        %v801 = vrot.slane %v800, 2
        %v802 = vadd.f32 %v800, %v801
        %v803 = vrot.slane %v802, 1
        %v804 = vadd.f32 %v802, %v803
        %v805 = vsub.f32 %v703, %v804
        %v806 = vsub.f32 %v704, %v804
        %v807 = vsub.f32 %v705, %v804
        %v808 = vsub.f32 %v706, %v804
        %v809 = vsub.f32 %v707, %v804
        %v810 = vsub.f32 %v708, %v804
        %v811 = vsub.f32 %v709, %v804
        %v812 = vsub.f32 %v710, %v804
        %v813 = vsub.f32 %v711, %v804
        %v814 = vsub.f32 %v712, %v804
        %v815 = vsub.f32 %v713, %v804
        %v816 = vsub.f32 %v714, %v804
        %v817 = vsub.f32 %v715, %v804
        %v818 = vsub.f32 %v716, %v804
        %v819 = vsub.f32 %v717, %v804
        %v820 = vsub.f32 %v718, %v804
        %v821 = vmul.f32 %v805, %v805
        %v822 = vmul.f32 %v806, %v806
        %v823 = vmul.f32 %v807, %v807
        %v824 = vmul.f32 %v808, %v808
        %v825 = vmul.f32 %v809, %v809
        %v826 = vmul.f32 %v810, %v810
        %v827 = vmul.f32 %v811, %v811
        %v828 = vmul.f32 %v812, %v812
        %v829 = vmul.f32 %v813, %v813
        %v830 = vmul.f32 %v814, %v814
        %v831 = vmul.f32 %v815, %v815
        %v832 = vmul.f32 %v816, %v816
        %v833 = vmul.f32 %v817, %v817
        %v834 = vmul.f32 %v818, %v818
        %v835 = vmul.f32 %v819, %v819
        %v836 = vmul.f32 %v820, %v820
        %v837 = vmul.f32 %v821, %v752
        %v838 = vmul.f32 %v822, %v753
        %v839 = vmul.f32 %v823, %v754
        %v840 = vmul.f32 %v824, %v755
        %v841 = vmul.f32 %v825, %v756
        %v842 = vmul.f32 %v826, %v757
        %v843 = vmul.f32 %v827, %v758
        %v844 = vmul.f32 %v828, %v759
        %v845 = vmul.f32 %v829, %v760
        %v846 = vmul.f32 %v830, %v761
        %v847 = vmul.f32 %v831, %v762
        %v848 = vmul.f32 %v832, %v763
        %v849 = vmul.f32 %v833, %v764
        %v850 = vmul.f32 %v834, %v765
        %v851 = vmul.f32 %v835, %v766
        %v852 = vmul.f32 %v836, %v767
        %v853 = vadd.f32 %v837, %v838
        %v854 = vadd.f32 %v853, %v839
        %v855 = vadd.f32 %v854, %v840
        %v856 = vadd.f32 %v855, %v841
        %v857 = vadd.f32 %v856, %v842
        %v858 = vadd.f32 %v857, %v843
        %v859 = vadd.f32 %v858, %v844
        %v860 = vadd.f32 %v859, %v845
        %v861 = vadd.f32 %v860, %v846
        %v862 = vadd.f32 %v861, %v847
        %v863 = vadd.f32 %v862, %v848
        %v864 = vadd.f32 %v863, %v849
        %v865 = vadd.f32 %v864, %v850
        %v866 = vadd.f32 %v865, %v851
        %v867 = vadd.f32 %v866, %v852
        %v868 = vrot.slane %v867, 4
        %v869 = vadd.f32 %v867, %v868
        %v870 = vrot.slane %v869, 2
        %v871 = vadd.f32 %v869, %v870
        %v872 = vrot.slane %v871, 1
        %v873 = vadd.f32 %v871, %v872
        %v874 = vadd.f32 %v873, 1e-05
        %v875 = vrsqrt.pop %v874
        %v876 = vmul.f32 %v875, %v874
        %v877 = vmul.f32 %v876, %v875
        %v878 = vmul.f32 0.5, %v877
        %v879 = vsub.f32 1.5, %v878
        %v880 = vmul.f32 %v875, %v879
        %vm881 = vweird.f32 %v874
        %vm882 = vweird.f32 %v875
        %vm883 = vmor %vm881, %vm882
        %v884 = vsel %vm883, %v875, %v880
        %v885 = vmul.f32 %v805, %v884
        %v886 = vmul.f32 %v806, %v884
        %v887 = vmul.f32 %v807, %v884
        %v888 = vmul.f32 %v808, %v884
        %v889 = vmul.f32 %v809, %v884
        %v890 = vmul.f32 %v810, %v884
        %v891 = vmul.f32 %v811, %v884
        %v892 = vmul.f32 %v812, %v884
        %v893 = vmul.f32 %v813, %v884
        %v894 = vmul.f32 %v814, %v884
        %v895 = vmul.f32 %v815, %v884
        %v896 = vmul.f32 %v816, %v884
        %v897 = vmul.f32 %v817, %v884
        %v898 = vmul.f32 %v818, %v884
        %v899 = vmul.f32 %v819, %v884
        %v900 = vmul.f32 %v820, %v884
        %v902 = vperm.slane %v432, 0
        %v904 = vmul.f32 %v885, %v902
        %v905 = vmul.f32 %v886, %v902
        %v906 = vmul.f32 %v887, %v902
        %v907 = vmul.f32 %v888, %v902
        %v908 = vmul.f32 %v889, %v902
        %v909 = vmul.f32 %v890, %v902
        %v910 = vmul.f32 %v891, %v902
        %v911 = vmul.f32 %v892, %v902
        %v912 = vmul.f32 %v893, %v902
        %v913 = vmul.f32 %v894, %v902
        %v914 = vmul.f32 %v895, %v902
        %v915 = vmul.f32 %v896, %v902
        %v916 = vmul.f32 %v897, %v902
        %v917 = vmul.f32 %v898, %v902
        %v918 = vmul.f32 %v899, %v902
        %v919 = vmul.f32 %v900, %v902
        %v921 = vperm.slane %v433, 0
        %v923 = vadd.f32 %v904, %v921
        %v924 = vadd.f32 %v905, %v921
        %v925 = vadd.f32 %v906, %v921
        %v926 = vadd.f32 %v907, %v921
        %v927 = vadd.f32 %v908, %v921
        %v928 = vadd.f32 %v909, %v921
        %v929 = vadd.f32 %v910, %v921
        %v930 = vadd.f32 %v911, %v921
        %v931 = vadd.f32 %v912, %v921
        %v932 = vadd.f32 %v913, %v921
        %v933 = vadd.f32 %v914, %v921
        %v934 = vadd.f32 %v915, %v921
        %v935 = vadd.f32 %v916, %v921
        %v936 = vadd.f32 %v917, %v921
        %v937 = vadd.f32 %v918, %v921
        %v938 = vadd.f32 %v919, %v921
        %v939 = vpack.c.bf16 %v923, %v923
        %v940 = vpack.c.bf16 %v924, %v924
        %v941 = vpack.c.bf16 %v925, %v925
        %v942 = vpack.c.bf16 %v926, %v926
        %v943 = vpack.c.bf16 %v927, %v927
        %v944 = vpack.c.bf16 %v928, %v928
        %v945 = vpack.c.bf16 %v929, %v929
        %v946 = vpack.c.bf16 %v930, %v930
        %v947 = vpack.c.bf16 %v931, %v931
        %v948 = vpack.c.bf16 %v932, %v932
        %v949 = vpack.c.bf16 %v933, %v933
        %v950 = vpack.c.bf16 %v934, %v934
        %v951 = vpack.c.bf16 %v935, %v935
        %v952 = vpack.c.bf16 %v936, %v936
        %v953 = vpack.c.bf16 %v937, %v937
        %v954 = vpack.c.bf16 %v938, %v938
        %955 = vst [vmem:[#allocation2] sm:$0xf] %v939
        %956 = vst [vmem:[#allocation2 + $0x4] sm:$0xf] %v940
        %957 = vst [vmem:[#allocation2 + $0x8] sm:$0xf] %v941
        %958 = vst [vmem:[#allocation2 + $0xc] sm:$0xf] %v942
        %959 = vst [vmem:[#allocation2 + $0x10] sm:$0xf] %v943
        %960 = vst [vmem:[#allocation2 + $0x14] sm:$0xf] %v944
        %961 = vst [vmem:[#allocation2 + $0x18] sm:$0xf] %v945
        %962 = vst [vmem:[#allocation2 + $0x1c] sm:$0xf] %v946
        %963 = vst [vmem:[#allocation2 + $0x20] sm:$0xf] %v947
        %964 = vst [vmem:[#allocation2 + $0x24] sm:$0xf] %v948
        %965 = vst [vmem:[#allocation2 + $0x28] sm:$0xf] %v949
        %966 = vst [vmem:[#allocation2 + $0x2c] sm:$0xf] %v950
        %967 = vst [vmem:[#allocation2 + $0x30] sm:$0xf] %v951
        %968 = vst [vmem:[#allocation2 + $0x34] sm:$0xf] %v952
        %969 = vst [vmem:[#allocation2 + $0x38] sm:$0xf] %v953
        %970 = vst [vmem:[#allocation2 + $0x3c] sm:$0xf] %v954
        %971 = vst [vmem:[%s356] sm:$0xff] %v923
        %972 = vst [vmem:[%s356 + $0x8] sm:$0xff] %v924
        %973 = vst [vmem:[%s356 + $0x10] sm:$0xff] %v925
        %974 = vst [vmem:[%s356 + $0x18] sm:$0xff] %v926
        %975 = vst [vmem:[%s356 + $0x20] sm:$0xff] %v927
        %976 = vst [vmem:[%s356 + $0x28] sm:$0xff] %v928
        %977 = vst [vmem:[%s356 + $0x30] sm:$0xff] %v929
        %978 = vst [vmem:[%s356 + $0x38] sm:$0xff] %v930
        %979 = vst [vmem:[%s356 + $0x40] sm:$0xff] %v931
        %980 = vst [vmem:[%s356 + $0x48] sm:$0xff] %v932
        %981 = vst [vmem:[%s356 + $0x50] sm:$0xff] %v933
        %982 = vst [vmem:[%s356 + $0x58] sm:$0xff] %v934
        %983 = vst [vmem:[%s356 + $0x60] sm:$0xff] %v935
        %984 = vst [vmem:[%s356 + $0x68] sm:$0xff] %v936
        %985 = vst [vmem:[%s356 + $0x70] sm:$0xff] %v937
        %986 = vst [vmem:[%s356 + $0x78] sm:$0xff] %v938
        %s987 = sand.u32 %s176, 1
        %s988 = scalar_lea.sflag [#allocation5], %s987
        %s989 = sand.u32 %s176, 1
        %s990 = smul.addr %s989, 128
        %s991 = scalar_lea.vmem [#allocation10], %s990
        // Predicated region
        $region65: #{tpu_custom_call.1} parent=43 // pred_check
          %p992 = pneg %p186
        $region66: #{tpu_custom_call.1} parent=43 // pred_check_branch
          %994 = sbr.rel (%p992) target = $region68
        $region67: #{tpu_custom_call.1} parent=43 // pred_region
          %996 = vsyncadd %s988, 0
          %s997 = smul.addr %s22, 16
          %s998 = smul.addr %s997, 8
          %s999 = scalar_lea.hbm %s6, %s998
          %s1000 = sshll.u32 %s991, 4
          %s1001 = int_to_ptr.vmem [resolvable:$true] %s1000
          %s1002 = sshll.u32 %s999, 4
          %s1003 = int_to_ptr.hbm [resolvable:$true] %s1002
          %1008 = dma.vmem_to_hbm [thread:$0]  %s1001, 2048, %s1003, %s988, 128, 128, 8
        $region68: #{tpu_custom_call.1} parent=43 // pred_fallthru
          _
      $region44: #{tpu_custom_call.1} parent=5 // pred_fallthru
        _
      %p1009 = scmp.le.s32.totalorder 2, %s17
      // Predicated region
      $region69: #{tpu_custom_call.1} parent=5 // pred_check
        %p1010 = pneg %p1009
      $region70: #{tpu_custom_call.1} parent=5 // pred_check_branch
        %1012 = sbr.rel (%p1010) target = $region72
      $region71: #{tpu_custom_call.1} parent=5 // pred_region
        %s1013 = ssub.s32 %s17, 2
        // Predicated region
        $region73: #{tpu_custom_call.1} parent=71 // pred_check
          %p1014 = pneg %p192
        $region74: #{tpu_custom_call.1} parent=71 // pred_check_branch
          %1016 = sbr.rel (%p1014) target = $region76
        $region75: #{tpu_custom_call.1} parent=71 // pred_region
          %s1017 = sand.u32 %s177, 1
          %s1018 = scalar_lea.sflag [#allocation5], %s1017
          %s1019 = sand.u32 %s177, 1
          %s1020 = smul.addr %s1019, 128
          %s1021 = scalar_lea.vmem [#allocation10], %s1020
          %1023 = dma.done %s1018, 2048
        $region76: #{tpu_custom_call.1} parent=71 // pred_fallthru
          _
      $region72: #{tpu_custom_call.1} parent=5 // pred_fallthru
        _
    $region6: #{tpu_custom_call.1} parent=1 // loop_footer
      %s21 = sadd.s32 1, %s17
    $region7: #{tpu_custom_call.1} parent=1 // loop_footer_branch
      %16 = sbr.rel target = $region3
    $region8: #{tpu_custom_call.1} parent=1 // loop_exit
      _
    %1024 = vsyncpa [#allocation4], 1
    %s1025 = scalar_lea.sflag [#allocation4], 1
    %1026 = vsyncpa %s1025, 1
    %1027 = vsyncpa [#allocation7], 1
    %1028 = vsyncpa [#allocation5], 1
    %s1029 = scalar_lea.sflag [#allocation5], 1
    %1030 = vsyncpa %s1029, 1

// kernel: tpu_custom_call.1
$region0: #{tpu_custom_call.1}
  #allocation0 [shape = 'u32[]', space=smem, size = 0x4, offset = 0x4, fixed_abs, tag = 'smem constant byte address 0x4 - core index']
  #allocation1 [shape = 'u32[72,128]{1,0:T(1,128)}', space=vmem, size = 0x9000, scoped, tag = 'internal scratch']
  #allocation2 [shape = 'bf16[128,128]{1,0:T(8,128)(2,1)}', space=vmem, size = 0x8000, scoped, tag = 'scratch operand']
  %s0 = inlined_call_operand.hbm [shape: bf16[128,128], index: 0, kind: input, shape index: {}]
  %s1 = inlined_call_operand.hbm [shape: bf16[128,128], index: 1, kind: input, shape index: {}]
  %s2 = inlined_call_operand.hbm [shape: bf16[2,128,128], index: 2, kind: input, shape index: {}]
  %s3 = inlined_call_operand.vmem [shape: f32[2,1,128], index: 3, kind: input, shape index: {}]
  %s4 = inlined_call_operand.hbm [shape: f32[2,1,128], index: 4, kind: input, shape index: {}]
  %s5 = inlined_call_operand.vmem [shape: f32[2,1,128], index: 5, kind: input, shape index: {}]
  %s6 = inlined_call_operand.hbm [shape: f32[2,128,128], index: 6, kind: output, shape index: {}]
  %s7 = sld [smem:[#allocation0]]
  $region77: #{tpu_custom_call.1} parent=0
    _
  %s9 = ssub.s32 1, %s7
  %s10 = scalar_select 0, %s9, %s7
  $region1: #{tpu_custom_call.1} parent=0
    #allocation3 [shape = 'u8[32768]{0}', space=vmem, size = 0x8000, scoped, tag = 'input window, operand 0, single buffered']
    #allocation4 [shape = 's32[2]{0}', space=sflag, size = 0x8, scoped, tag = 'scoped memory for tpu_custom_call.1']
    #allocation5 [shape = 's32[2]{0}', space=sflag, size = 0x8, scoped, tag = 'scoped memory for tpu_custom_call.1']
    #allocation6 [shape = 'u8[32768]{0}', space=vmem, size = 0x8000, scoped, tag = 'input window, operand 1, single buffered']
    #allocation7 [shape = 's32[1]{0}', space=sflag, size = 0x4, scoped, tag = 'scoped memory for tpu_custom_call.1']
    #allocation8 [shape = 'u8[65536]{0}', space=vmem, size = 0x10000, scoped, tag = 'input window, operand 2']
    #allocation9 [shape = 'u8[1024]{0}', space=vmem, size = 0x400, scoped, tag = 'input window, operand 4']
    #allocation10 [shape = 'u8[131072]{0}', space=vmem, size = 0x20000, scoped, tag = 'output window, operand 0']
    %11 = vsyncpa [#allocation4], 0
    %12 = vsyncpa [#allocation7], 0
    %13 = vsyncpa [#allocation5], 0
    %s14 = scalar_lea.sflag [#allocation5], 1
    %15 = vsyncpa %s14, 0
    loop: start=0, step=1, limit=4
    $region2: #{tpu_custom_call.1} parent=1 // loop_pre_header
      _
    $region3: #{tpu_custom_call.1} parent=1 // loop_header
      %s17 = sphi 0, %s21
      %p18 = scmp.ge.s32.totalorder %s17, 4
      %s25 = sphi 0, %s25
      %s27 = sphi 0, %s25
      %s28 = sphi 0, %s27
      %s42 = sphi 0, %s28
      %s46 = sphi 0, %s46
      %s48 = sphi 0, %s46
      %s49 = sphi 0, %s48
      %s63 = sphi 0, %s49
      %s69 = sphi 0, %s71
      %s72 = sphi 0, %s69
      %s73 = sphi 0, %s72
      %s89 = sphi 0, %s73
      %s95 = sphi 0, %s97
      %s98 = sphi 0, %s95
      %s99 = sphi 0, %s98
      %s115 = sphi 0, %s99
      %s121 = sphi 0, %s123
      %s124 = sphi 0, %s121
      %s125 = sphi 0, %s124
      %s141 = sphi 0, %s125
      %s147 = sphi 0, %s149
      %s150 = sphi 0, %s147
      %s151 = sphi 0, %s150
      %s167 = sphi 0, %s151
      %s173 = sphi 0, %s175
      %s176 = sphi 0, %s173
      %s177 = sphi 0, %s176
      %s193 = sphi 0, %s177
    $region4: #{tpu_custom_call.1} parent=1 // loop_header_branch
      %20 = sbr.rel (%p18) target = $region8
    $region5: #{tpu_custom_call.1} parent=1 // loop_body
      %s22 = ssub.s32 %s17, 1
      %s23 = ssub.s32 %s17, 2
      %s24 = sadd.s32 %s17, 1
      %s26 = sadd.s32 %s25, 1
      %p29 = scmp.eq.s32.totalorder %s17, 1
      %p30 = scmp.ne.s32.totalorder %s25, %s27
      %p31 = scmp.eq.s32.totalorder %s17, 0
      %p32 = por %p30, %p31
      %p33 = scmp.ne.s32.totalorder %s25, %s27
      %p34 = scmp.eq.s32.totalorder %s22, 1
      %p35 = por %p33, %p34
      %p36 = scmp.ne.s32.totalorder %s27, %s28
      %p37 = scmp.eq.s32.totalorder %s22, 0
      %p38 = por %p36, %p37
      %p39 = scmp.ne.s32.totalorder %s27, %s28
      %p40 = scmp.eq.s32.totalorder %s23, 1
      %p41 = por %p39, %p40
      %p43 = scmp.ne.s32.totalorder %s28, %s42
      %p44 = scmp.eq.s32.totalorder %s23, 0
      %p45 = por %p43, %p44
      %s47 = sadd.s32 %s46, 1
      %p50 = scmp.eq.s32.totalorder %s17, 1
      %p51 = scmp.ne.s32.totalorder %s46, %s48
      %p52 = scmp.eq.s32.totalorder %s17, 0
      %p53 = por %p51, %p52
      %p54 = scmp.ne.s32.totalorder %s46, %s48
      %p55 = scmp.eq.s32.totalorder %s22, 1
      %p56 = por %p54, %p55
      %p57 = scmp.ne.s32.totalorder %s48, %s49
      %p58 = scmp.eq.s32.totalorder %s22, 0
      %p59 = por %p57, %p58
      %p60 = scmp.ne.s32.totalorder %s48, %s49
      %p61 = scmp.eq.s32.totalorder %s23, 1
      %p62 = por %p60, %p61
      %p64 = scmp.ne.s32.totalorder %s49, %s63
      %p65 = scmp.eq.s32.totalorder %s23, 0
      %p66 = por %p64, %p65
      %s67 = ssub.s32 %s17, %s24
      %p68 = scmp.eq.s32.totalorder %s67, 0
      %s70 = sadd.s32 %s69, 1
      %s71 = scalar_select %p68, %s69, %s70
      %p74 = pneg %p68
      %p75 = scmp.eq.s32.totalorder %s17, 1
      %p76 = por %p74, %p75
      %p77 = scmp.ne.s32.totalorder %s69, %s72
      %p78 = scmp.eq.s32.totalorder %s17, 0
      %p79 = por %p77, %p78
      %p80 = scmp.ne.s32.totalorder %s69, %s72
      %p81 = scmp.eq.s32.totalorder %s22, 1
      %p82 = por %p80, %p81
      %p83 = scmp.ne.s32.totalorder %s72, %s73
      %p84 = scmp.eq.s32.totalorder %s22, 0
      %p85 = por %p83, %p84
      %p86 = scmp.ne.s32.totalorder %s72, %s73
      %p87 = scmp.eq.s32.totalorder %s23, 1
      %p88 = por %p86, %p87
      %p90 = scmp.ne.s32.totalorder %s73, %s89
      %p91 = scmp.eq.s32.totalorder %s23, 0
      %p92 = por %p90, %p91
      %s93 = ssub.s32 %s17, %s24
      %p94 = scmp.eq.s32.totalorder %s93, 0
      %s96 = sadd.s32 %s95, 1
      %s97 = scalar_select %p94, %s95, %s96
      %p100 = pneg %p94
      %p101 = scmp.eq.s32.totalorder %s17, 1
      %p102 = por %p100, %p101
      %p103 = scmp.ne.s32.totalorder %s95, %s98
      %p104 = scmp.eq.s32.totalorder %s17, 0
      %p105 = por %p103, %p104
      %p106 = scmp.ne.s32.totalorder %s95, %s98
      %p107 = scmp.eq.s32.totalorder %s22, 1
      %p108 = por %p106, %p107
      %p109 = scmp.ne.s32.totalorder %s98, %s99
      %p110 = scmp.eq.s32.totalorder %s22, 0
      %p111 = por %p109, %p110
      %p112 = scmp.ne.s32.totalorder %s98, %s99
      %p113 = scmp.eq.s32.totalorder %s23, 1
      %p114 = por %p112, %p113
      %p116 = scmp.ne.s32.totalorder %s99, %s115
      %p117 = scmp.eq.s32.totalorder %s23, 0
      %p118 = por %p116, %p117
      %s119 = ssub.s32 %s17, %s24
      %p120 = scmp.eq.s32.totalorder %s119, 0
      %s122 = sadd.s32 %s121, 1
      %s123 = scalar_select %p120, %s121, %s122
      %p126 = pneg %p120
      %p127 = scmp.eq.s32.totalorder %s17, 1
      %p128 = por %p126, %p127
      %p129 = scmp.ne.s32.totalorder %s121, %s124
      %p130 = scmp.eq.s32.totalorder %s17, 0
      %p131 = por %p129, %p130
      %p132 = scmp.ne.s32.totalorder %s121, %s124
      %p133 = scmp.eq.s32.totalorder %s22, 1
      %p134 = por %p132, %p133
      %p135 = scmp.ne.s32.totalorder %s124, %s125
      %p136 = scmp.eq.s32.totalorder %s22, 0
      %p137 = por %p135, %p136
      %p138 = scmp.ne.s32.totalorder %s124, %s125
      %p139 = scmp.eq.s32.totalorder %s23, 1
      %p140 = por %p138, %p139
      %p142 = scmp.ne.s32.totalorder %s125, %s141
      %p143 = scmp.eq.s32.totalorder %s23, 0
      %p144 = por %p142, %p143
      %s145 = ssub.s32 %s17, %s24
      %p146 = scmp.eq.s32.totalorder %s145, 0
      %s148 = sadd.s32 %s147, 1
      %s149 = scalar_select %p146, %s147, %s148
      %p152 = pneg %p146
      %p153 = scmp.eq.s32.totalorder %s17, 1
      %p154 = por %p152, %p153
      %p155 = scmp.ne.s32.totalorder %s147, %s150
      %p156 = scmp.eq.s32.totalorder %s17, 0
      %p157 = por %p155, %p156
      %p158 = scmp.ne.s32.totalorder %s147, %s150
      %p159 = scmp.eq.s32.totalorder %s22, 1
      %p160 = por %p158, %p159
      %p161 = scmp.ne.s32.totalorder %s150, %s151
      %p162 = scmp.eq.s32.totalorder %s22, 0
      %p163 = por %p161, %p162
      %p164 = scmp.ne.s32.totalorder %s150, %s151
      %p165 = scmp.eq.s32.totalorder %s23, 1
      %p166 = por %p164, %p165
      %p168 = scmp.ne.s32.totalorder %s151, %s167
      %p169 = scmp.eq.s32.totalorder %s23, 0
      %p170 = por %p168, %p169
      %s171 = ssub.s32 %s17, %s24
      %p172 = scmp.eq.s32.totalorder %s171, 0
      %s174 = sadd.s32 %s173, 1
      %s175 = scalar_select %p172, %s173, %s174
      %p178 = pneg %p172
      %p179 = scmp.eq.s32.totalorder %s17, 1
      %p180 = por %p178, %p179
      %p181 = scmp.ne.s32.totalorder %s173, %s176
      %p182 = scmp.eq.s32.totalorder %s17, 0
      %p183 = por %p181, %p182
      %p184 = scmp.ne.s32.totalorder %s173, %s176
      %p185 = scmp.eq.s32.totalorder %s22, 1
      %p186 = por %p184, %p185
      %p187 = scmp.ne.s32.totalorder %s176, %s177
      %p188 = scmp.eq.s32.totalorder %s22, 0
      %p189 = por %p187, %p188
      %p190 = scmp.ne.s32.totalorder %s176, %s177
      %p191 = scmp.eq.s32.totalorder %s23, 1
      %p192 = por %p190, %p191
      %p194 = scmp.ne.s32.totalorder %s177, %s193
      %p195 = scmp.eq.s32.totalorder %s23, 0
      %p196 = por %p194, %p195
      %p197 = scmp.le.s32.totalorder 1, %s17
      %p198 = scmp.lt.s32.totalorder %s17, 3
      %p199 = pnand %p197, %p198
      %p200 = pneg %p199
      // Predicated region
      $region9: #{tpu_custom_call.1} parent=5 // pred_check
        _
      $region10: #{tpu_custom_call.1} parent=5 // pred_check_branch
        %202 = sbr.rel (%p199) target = $region12
      $region11: #{tpu_custom_call.1} parent=5 // pred_region
        %s203 = ssub.s32 %s17, 1
        // Predicated region
        $region13: #{tpu_custom_call.1} parent=11 // pred_check
          %p204 = pneg %p38
        $region14: #{tpu_custom_call.1} parent=11 // pred_check_branch
          %206 = sbr.rel (%p204) target = $region16
        $region15: #{tpu_custom_call.1} parent=11 // pred_region
          %208 = vsyncadd [#allocation4], 0
          %s209 = sshll.u32 %s0, 4
          %s210 = int_to_ptr.hbm [resolvable:$true] %s209
          %s211 = sshll.u32 [#allocation3], 4
          %s212 = int_to_ptr.vmem [resolvable:$true] %s211
          %217 = dma.hbm_to_vmem [thread:$0]  %s210, 1024, %s212, [#allocation4], 64, 64, 4
        $region16: #{tpu_custom_call.1} parent=11 // pred_fallthru
          _
        // Predicated region
        $region17: #{tpu_custom_call.1} parent=11 // pred_check
          %p218 = pneg %p59
        $region18: #{tpu_custom_call.1} parent=11 // pred_check_branch
          %220 = sbr.rel (%p218) target = $region20
        $region19: #{tpu_custom_call.1} parent=11 // pred_region
          %222 = vsyncadd [#allocation7], 0
          %s223 = sshll.u32 %s1, 4
          %s224 = int_to_ptr.hbm [resolvable:$true] %s223
          %s225 = sshll.u32 [#allocation6], 4
          %s226 = int_to_ptr.vmem [resolvable:$true] %s225
          %231 = dma.hbm_to_vmem [thread:$0]  %s224, 1024, %s226, [#allocation7], 64, 64, 4
        $region20: #{tpu_custom_call.1} parent=11 // pred_fallthru
          _
      $region12: #{tpu_custom_call.1} parent=5 // pred_fallthru
        _
      %p232 = scmp.lt.s32.totalorder %s17, 2
      // Predicated region
      $region21: #{tpu_custom_call.1} parent=5 // pred_check
        %p233 = pneg %p232
      $region22: #{tpu_custom_call.1} parent=5 // pred_check_branch
        %235 = sbr.rel (%p233) target = $region24
      $region23: #{tpu_custom_call.1} parent=5 // pred_region
        // Predicated region
        $region25: #{tpu_custom_call.1} parent=23 // pred_check
          %p236 = pneg %p79
        $region26: #{tpu_custom_call.1} parent=23 // pred_check_branch
          %238 = sbr.rel (%p236) target = $region28
        $region27: #{tpu_custom_call.1} parent=23 // pred_region
          %s239 = sand.u32 %s17, 1
          %s240 = scalar_lea.sflag [#allocation4], %s239
          %s241 = sand.u32 %s69, 1
          %s242 = smul.addr %s241, 64
          %s243 = scalar_lea.vmem [#allocation8], %s242
          %245 = vsyncadd %s240, 0
          %s246 = smul.addr %s17, 16
          %s247 = smul.addr %s246, 4
          %s248 = scalar_lea.hbm %s2, %s247
          %s249 = sshll.u32 %s248, 4
          %s250 = int_to_ptr.hbm [resolvable:$true] %s249
          %s251 = sshll.u32 %s243, 4
          %s252 = int_to_ptr.vmem [resolvable:$true] %s251
          %257 = dma.hbm_to_vmem [thread:$0]  %s250, 1024, %s252, %s240, 64, 64, 4
        $region28: #{tpu_custom_call.1} parent=23 // pred_fallthru
          _
        // Predicated region
        $region29: #{tpu_custom_call.1} parent=23 // pred_check
          %p258 = pneg %p105
        $region30: #{tpu_custom_call.1} parent=23 // pred_check_branch
          %260 = sbr.rel (%p258) target = $region32
        $region31: #{tpu_custom_call.1} parent=23 // pred_region
          %p261 = scmp.lt.s32.totalorder %s17, 1
          %s262 = scalar_select %p261, %s17, 1
          %s263 = scalar_lea.vmem %s3, %s262
        $region32: #{tpu_custom_call.1} parent=23 // pred_fallthru
          _
        // Predicated region
        $region33: #{tpu_custom_call.1} parent=23 // pred_check
          %p264 = pneg %p131
        $region34: #{tpu_custom_call.1} parent=23 // pred_check_branch
          %266 = sbr.rel (%p264) target = $region36
        $region35: #{tpu_custom_call.1} parent=23 // pred_region
          %s267 = sand.u32 %s17, 1
          %s268 = scalar_lea.sflag [#allocation4], %s267
          %s269 = sand.u32 %s121, 1
          %s270 = scalar_lea.vmem [#allocation9], %s269
          %272 = vsyncadd %s268, 0
          %s273 = scalar_lea.hbm %s4, %s17
          %s275 = sshll.u32 %s273, 4
          %s276 = int_to_ptr.hbm [resolvable:$true] %s275
          %s277 = sshll.u32 %s270, 4
          %s278 = int_to_ptr.vmem [resolvable:$true] %s277
          %280 = dma.hbm_to_vmem [thread:$0]  %s276, 16, %s278, %s268
        $region36: #{tpu_custom_call.1} parent=23 // pred_fallthru
          _
        // Predicated region
        $region37: #{tpu_custom_call.1} parent=23 // pred_check
          %p281 = pneg %p157
        $region38: #{tpu_custom_call.1} parent=23 // pred_check_branch
          %283 = sbr.rel (%p281) target = $region40
        $region39: #{tpu_custom_call.1} parent=23 // pred_region
          %p284 = scmp.lt.s32.totalorder %s17, 1
          %s285 = scalar_select %p284, %s17, 1
          %s286 = scalar_lea.vmem %s5, %s285
        $region40: #{tpu_custom_call.1} parent=23 // pred_fallthru
          _
      $region24: #{tpu_custom_call.1} parent=5 // pred_fallthru
        _
      %p287 = scmp.le.s32.totalorder 1, %s17
      %p288 = scmp.lt.s32.totalorder %s17, 3
      %p289 = pnand %p287, %p288
      %p290 = pneg %p289
      // Predicated region
      $region41: #{tpu_custom_call.1} parent=5 // pred_check
        _
      $region42: #{tpu_custom_call.1} parent=5 // pred_check_branch
        %292 = sbr.rel (%p289) target = $region44
      $region43: #{tpu_custom_call.1} parent=5 // pred_region
        %s293 = ssub.s32 %s17, 1
        // Predicated region
        $region45: #{tpu_custom_call.1} parent=43 // pred_check
          %p294 = pneg %p38
        $region46: #{tpu_custom_call.1} parent=43 // pred_check_branch
          %296 = sbr.rel (%p294) target = $region48
        $region47: #{tpu_custom_call.1} parent=43 // pred_region
          %298 = dma.done [#allocation4], 1024
        $region48: #{tpu_custom_call.1} parent=43 // pred_fallthru
          _
        // Predicated region
        $region49: #{tpu_custom_call.1} parent=43 // pred_check
          %p299 = pneg %p59
        $region50: #{tpu_custom_call.1} parent=43 // pred_check_branch
          %301 = sbr.rel (%p299) target = $region52
        $region51: #{tpu_custom_call.1} parent=43 // pred_region
          %303 = dma.done [#allocation7], 1024
        $region52: #{tpu_custom_call.1} parent=43 // pred_fallthru
          _
        %s304 = sand.u32 %s22, 1
        %s305 = scalar_lea.sflag [#allocation4], %s304
        %s306 = sand.u32 %s72, 1
        %s307 = smul.addr %s306, 64
        %s308 = scalar_lea.vmem [#allocation8], %s307
        // Predicated region
        $region53: #{tpu_custom_call.1} parent=43 // pred_check
          %p309 = pneg %p85
        $region54: #{tpu_custom_call.1} parent=43 // pred_check_branch
          %311 = sbr.rel (%p309) target = $region56
        $region55: #{tpu_custom_call.1} parent=43 // pred_region
          %313 = dma.done %s305, 1024
        $region56: #{tpu_custom_call.1} parent=43 // pred_fallthru
          _
        %s314 = sand.u32 %s22, 1
        %s315 = scalar_lea.sflag [#allocation4], %s314
        %s316 = sand.u32 %s124, 1
        %s317 = scalar_lea.vmem [#allocation9], %s316
        // Predicated region
        $region57: #{tpu_custom_call.1} parent=43 // pred_check
          %p318 = pneg %p137
        $region58: #{tpu_custom_call.1} parent=43 // pred_check_branch
          %320 = sbr.rel (%p318) target = $region60
        $region59: #{tpu_custom_call.1} parent=43 // pred_region
          %322 = dma.done %s315, 16
        $region60: #{tpu_custom_call.1} parent=43 // pred_fallthru
          _
        %p323 = pneg %p38
        %p324 = pneg %p35
        %p325 = pneg %p59
        %p326 = pneg %p56
        %s327 = sand.u32 %s22, 1
        %s328 = scalar_lea.sflag [#allocation4], %s327
        %s329 = sand.u32 %s72, 1
        %s330 = smul.addr %s329, 64
        %s331 = scalar_lea.vmem [#allocation8], %s330
        %p332 = pneg %p85
        %p333 = pneg %p82
        %p334 = scmp.lt.s32.totalorder %s22, 1
        %s335 = scalar_select %p334, %s22, 1
        %s336 = scalar_lea.vmem %s3, %s335
        %p337 = pneg %p111
        %p338 = pneg %p108
        %s339 = sand.u32 %s22, 1
        %s340 = scalar_lea.sflag [#allocation4], %s339
        %s341 = sand.u32 %s124, 1
        %s342 = scalar_lea.vmem [#allocation9], %s341
        %p343 = pneg %p137
        %p344 = pneg %p134
        %p345 = scmp.lt.s32.totalorder %s22, 1
        %s346 = scalar_select %p345, %s22, 1
        %s347 = scalar_lea.vmem %s5, %s346
        %p348 = pneg %p163
        %p349 = pneg %p160
        %p350 = pneg %p189
        %p351 = pneg %p186
        %s352 = sand.u32 %s176, 1
        %s353 = scalar_lea.sflag [#allocation5], %s352
        %s354 = sand.u32 %s176, 1
        %s355 = smul.addr %s354, 128
        %s356 = scalar_lea.vmem [#allocation10], %s355
        %p357 = scmp.lt.s32.totalorder %s22, 1
        %s358 = scalar_select %p357, %s22, 1
        %s359 = scalar_lea.vmem %s3, %s358
        %p360 = scmp.lt.s32.totalorder %s22, 1
        %s361 = scalar_select %p360, %s22, 1
        %s362 = scalar_lea.vmem %s5, %s361
        %p363 = scmp.eq.s32.totalorder %s22, 0
        // Predicated region
        $region61: #{tpu_custom_call.1} parent=43 // pred_check
          %p364 = pneg %p363
        $region62: #{tpu_custom_call.1} parent=43 // pred_check_branch
          %366 = sbr.rel (%p364) target = $region64
        $region63: #{tpu_custom_call.1} parent=43 // pred_region
          %v367 = vld [vmem:[#allocation6] sm:$0xf]
          %v368 = vld [vmem:[#allocation6 + $0x4] sm:$0xf]
          %v369 = vld [vmem:[#allocation6 + $0x8] sm:$0xf]
          %v370 = vld [vmem:[#allocation6 + $0xc] sm:$0xf]
          %v371 = vld [vmem:[#allocation6 + $0x10] sm:$0xf]
          %v372 = vld [vmem:[#allocation6 + $0x14] sm:$0xf]
          %v373 = vld [vmem:[#allocation6 + $0x18] sm:$0xf]
          %v374 = vld [vmem:[#allocation6 + $0x1c] sm:$0xf]
          %v375 = vld [vmem:[#allocation6 + $0x20] sm:$0xf]
          %v376 = vld [vmem:[#allocation6 + $0x24] sm:$0xf]
          %v377 = vld [vmem:[#allocation6 + $0x28] sm:$0xf]
          %v378 = vld [vmem:[#allocation6 + $0x2c] sm:$0xf]
          %v379 = vld [vmem:[#allocation6 + $0x30] sm:$0xf]
          %v380 = vld [vmem:[#allocation6 + $0x34] sm:$0xf]
          %v381 = vld [vmem:[#allocation6 + $0x38] sm:$0xf]
          %v382 = vld [vmem:[#allocation6 + $0x3c] sm:$0xf]
          %383 = vst [vmem:[#allocation2] sm:$0xf] %v367
          %384 = vst [vmem:[#allocation2 + $0x4] sm:$0xf] %v368
          %385 = vst [vmem:[#allocation2 + $0x8] sm:$0xf] %v369
          %386 = vst [vmem:[#allocation2 + $0xc] sm:$0xf] %v370
          %387 = vst [vmem:[#allocation2 + $0x10] sm:$0xf] %v371
          %388 = vst [vmem:[#allocation2 + $0x14] sm:$0xf] %v372
          %389 = vst [vmem:[#allocation2 + $0x18] sm:$0xf] %v373
          %390 = vst [vmem:[#allocation2 + $0x1c] sm:$0xf] %v374
          %391 = vst [vmem:[#allocation2 + $0x20] sm:$0xf] %v375
          %392 = vst [vmem:[#allocation2 + $0x24] sm:$0xf] %v376
          %393 = vst [vmem:[#allocation2 + $0x28] sm:$0xf] %v377
          %394 = vst [vmem:[#allocation2 + $0x2c] sm:$0xf] %v378
          %395 = vst [vmem:[#allocation2 + $0x30] sm:$0xf] %v379
          %396 = vst [vmem:[#allocation2 + $0x34] sm:$0xf] %v380
          %397 = vst [vmem:[#allocation2 + $0x38] sm:$0xf] %v381
          %398 = vst [vmem:[#allocation2 + $0x3c] sm:$0xf] %v382
        $region64: #{tpu_custom_call.1} parent=43 // pred_fallthru
          _
        %v399 = vld [vmem:[#allocation2] sm:$0xf]
        %v400 = vld [vmem:[#allocation2 + $0x4] sm:$0xf]
        %v401 = vld [vmem:[#allocation2 + $0x8] sm:$0xf]
        %v402 = vld [vmem:[#allocation2 + $0xc] sm:$0xf]
        %v403 = vld [vmem:[#allocation2 + $0x10] sm:$0xf]
        %v404 = vld [vmem:[#allocation2 + $0x14] sm:$0xf]
        %v405 = vld [vmem:[#allocation2 + $0x18] sm:$0xf]
        %v406 = vld [vmem:[#allocation2 + $0x1c] sm:$0xf]
        %v407 = vld [vmem:[#allocation2 + $0x20] sm:$0xf]
        %v408 = vld [vmem:[#allocation2 + $0x24] sm:$0xf]
        %v409 = vld [vmem:[#allocation2 + $0x28] sm:$0xf]
        %v410 = vld [vmem:[#allocation2 + $0x2c] sm:$0xf]
        %v411 = vld [vmem:[#allocation2 + $0x30] sm:$0xf]
        %v412 = vld [vmem:[#allocation2 + $0x34] sm:$0xf]
        %v413 = vld [vmem:[#allocation2 + $0x38] sm:$0xf]
        %v414 = vld [vmem:[#allocation2 + $0x3c] sm:$0xf]
        %v415 = vld [vmem:[%s308] sm:$0xf]
        %v416 = vld [vmem:[%s308 + $0x4] sm:$0xf]
        %v417 = vld [vmem:[%s308 + $0x8] sm:$0xf]
        %v418 = vld [vmem:[%s308 + $0xc] sm:$0xf]
        %v419 = vld [vmem:[%s308 + $0x10] sm:$0xf]
        %v420 = vld [vmem:[%s308 + $0x14] sm:$0xf]
        %v421 = vld [vmem:[%s308 + $0x18] sm:$0xf]
        %v422 = vld [vmem:[%s308 + $0x1c] sm:$0xf]
        %v423 = vld [vmem:[%s308 + $0x20] sm:$0xf]
        %v424 = vld [vmem:[%s308 + $0x24] sm:$0xf]
        %v425 = vld [vmem:[%s308 + $0x28] sm:$0xf]
        %v426 = vld [vmem:[%s308 + $0x2c] sm:$0xf]
        %v427 = vld [vmem:[%s308 + $0x30] sm:$0xf]
        %v428 = vld [vmem:[%s308 + $0x34] sm:$0xf]
        %v429 = vld [vmem:[%s308 + $0x38] sm:$0xf]
        %v430 = vld [vmem:[%s308 + $0x3c] sm:$0xf]
        %v431 = vld [vmem:[%s359] sm:$0x1]
        %v432 = vld [vmem:[%s317] sm:$0x1]
        %v433 = vld [vmem:[%s362] sm:$0x1]
        %v450 = vunpack.c.l.b16 %v399
        %v451 = vunpack.c.l.b16 %v400
        %v452 = vunpack.c.l.b16 %v401
        %v453 = vunpack.c.l.b16 %v402
        %v454 = vunpack.c.l.b16 %v403
        %v455 = vunpack.c.l.b16 %v404
        %v456 = vunpack.c.l.b16 %v405
        %v457 = vunpack.c.l.b16 %v406
        %v458 = vunpack.c.l.b16 %v407
        %v459 = vunpack.c.l.b16 %v408
        %v460 = vunpack.c.l.b16 %v409
        %v461 = vunpack.c.l.b16 %v410
        %v462 = vunpack.c.l.b16 %v411
        %v463 = vunpack.c.l.b16 %v412
        %v464 = vunpack.c.l.b16 %v413
        %v465 = vunpack.c.l.b16 %v414
        %v466 = vpack.c.b16 %v451, %v450
        %v467 = vpack.c.b16 %v453, %v452
        %v468 = vpack.c.b16 %v455, %v454
        %v469 = vpack.c.b16 %v457, %v456
        %v470 = vpack.c.b16 %v459, %v458
        %v471 = vpack.c.b16 %v461, %v460
        %v472 = vpack.c.b16 %v463, %v462
        %v473 = vpack.c.b16 %v465, %v464
        %v498 = vunpack.c.l.b16 %v415
        %v499 = vunpack.c.l.b16 %v416
        %v500 = vunpack.c.l.b16 %v417
        %v501 = vunpack.c.l.b16 %v418
        %v502 = vunpack.c.l.b16 %v419
        %v503 = vunpack.c.l.b16 %v420
        %v504 = vunpack.c.l.b16 %v421
        %v505 = vunpack.c.l.b16 %v422
        %v506 = vunpack.c.l.b16 %v423
        %v507 = vunpack.c.l.b16 %v424
        %v508 = vunpack.c.l.b16 %v425
        %v509 = vunpack.c.l.b16 %v426
        %v510 = vunpack.c.l.b16 %v427
        %v511 = vunpack.c.l.b16 %v428
        %v512 = vunpack.c.l.b16 %v429
        %v513 = vunpack.c.l.b16 %v430
        %v514 = vpack.c.b16 %v499, %v498
        %v515 = vpack.c.b16 %v501, %v500
        %v516 = vpack.c.b16 %v503, %v502
        %v517 = vpack.c.b16 %v505, %v504
        %v518 = vpack.c.b16 %v507, %v506
        %v519 = vpack.c.b16 %v509, %v508
        %v520 = vpack.c.b16 %v511, %v510
        %v521 = vpack.c.b16 %v513, %v512
        %530 = vmatpush.bf16.msra.mxu0 %v521
        %531 = vmatpush.bf16.msra.mxu0 %v520
        %532 = vmatpush.bf16.msra.mxu0 %v519
        %533 = vmatpush.bf16.msra.mxu0 %v518
        %534 = vmatpush.bf16.msra.mxu0 %v517
        %535 = vmatpush.bf16.msra.mxu0 %v516
        %536 = vmatpush.bf16.msra.mxu0 %v515
        %537 = vmatpush.bf16.msra.mxu0 %v514
        %538 = vmatmul.bf16.gmra.mxu0 %v466
        %v539 = vpop.f32.mrf.mxu0
        %v540 = vadd.f32 0.0, %v539
        %v541 = vpop.f32.mrf.mxu0
        %v542 = vadd.f32 0.0, %v541
        %543 = vmatmul.bf16.gmra.mxu0 %v467
        %v544 = vpop.f32.mrf.mxu0
        %v545 = vadd.f32 0.0, %v544
        %v546 = vpop.f32.mrf.mxu0
        %v547 = vadd.f32 0.0, %v546
        %548 = vmatmul.bf16.gmra.mxu0 %v468
        %v549 = vpop.f32.mrf.mxu0
        %v550 = vadd.f32 0.0, %v549
        %v551 = vpop.f32.mrf.mxu0
        %v552 = vadd.f32 0.0, %v551
        %553 = vmatmul.bf16.gmra.mxu0 %v469
        %v554 = vpop.f32.mrf.mxu0
        %v555 = vadd.f32 0.0, %v554
        %v556 = vpop.f32.mrf.mxu0
        %v557 = vadd.f32 0.0, %v556
        %558 = vmatmul.bf16.gmra.mxu0 %v470
        %v559 = vpop.f32.mrf.mxu0
        %v560 = vadd.f32 0.0, %v559
        %v561 = vpop.f32.mrf.mxu0
        %v562 = vadd.f32 0.0, %v561
        %563 = vmatmul.bf16.gmra.mxu0 %v471
        %v564 = vpop.f32.mrf.mxu0
        %v565 = vadd.f32 0.0, %v564
        %v566 = vpop.f32.mrf.mxu0
        %v567 = vadd.f32 0.0, %v566
        %568 = vmatmul.bf16.gmra.mxu0 %v472
        %v569 = vpop.f32.mrf.mxu0
        %v570 = vadd.f32 0.0, %v569
        %v571 = vpop.f32.mrf.mxu0
        %v572 = vadd.f32 0.0, %v571
        %573 = vmatmul.bf16.gmra.mxu0 %v473
        %v574 = vpop.f32.mrf.mxu0
        %v575 = vadd.f32 0.0, %v574
        %v576 = vpop.f32.mrf.mxu0
        %v577 = vadd.f32 0.0, %v576
        %578 = vdwg.mxu0
        %v579 = vpack.c.bf16 %v542, %v540
        %v580 = vpack.c.bf16 %v547, %v545
        %v581 = vpack.c.bf16 %v552, %v550
        %v582 = vpack.c.bf16 %v557, %v555
        %v583 = vpack.c.bf16 %v562, %v560
        %v584 = vpack.c.bf16 %v567, %v565
        %v585 = vpack.c.bf16 %v572, %v570
        %v586 = vpack.c.bf16 %v577, %v575
        %v587 = vld [vmem:[#allocation3] sm:$0xf]
        %v588 = vld [vmem:[#allocation3 + $0x4] sm:$0xf]
        %v589 = vld [vmem:[#allocation3 + $0x8] sm:$0xf]
        %v590 = vld [vmem:[#allocation3 + $0xc] sm:$0xf]
        %v591 = vld [vmem:[#allocation3 + $0x10] sm:$0xf]
        %v592 = vld [vmem:[#allocation3 + $0x14] sm:$0xf]
        %v593 = vld [vmem:[#allocation3 + $0x18] sm:$0xf]
        %v594 = vld [vmem:[#allocation3 + $0x1c] sm:$0xf]
        %v595 = vld [vmem:[#allocation3 + $0x20] sm:$0xf]
        %v596 = vld [vmem:[#allocation3 + $0x24] sm:$0xf]
        %v597 = vld [vmem:[#allocation3 + $0x28] sm:$0xf]
        %v598 = vld [vmem:[#allocation3 + $0x2c] sm:$0xf]
        %v599 = vld [vmem:[#allocation3 + $0x30] sm:$0xf]
        %v600 = vld [vmem:[#allocation3 + $0x34] sm:$0xf]
        %v601 = vld [vmem:[#allocation3 + $0x38] sm:$0xf]
        %v602 = vld [vmem:[#allocation3 + $0x3c] sm:$0xf]
        %v604 = vperm.slane %v431, 0
        %v622 = vunpack.c.l.b16 %v587
        %v623 = vunpack.c.l.b16 %v588
        %v624 = vunpack.c.l.b16 %v589
        %v625 = vunpack.c.l.b16 %v590
        %v626 = vunpack.c.l.b16 %v591
        %v627 = vunpack.c.l.b16 %v592
        %v628 = vunpack.c.l.b16 %v593
        %v629 = vunpack.c.l.b16 %v594
        %v630 = vunpack.c.l.b16 %v595
        %v631 = vunpack.c.l.b16 %v596
        %v632 = vunpack.c.l.b16 %v597
        %v633 = vunpack.c.l.b16 %v598
        %v634 = vunpack.c.l.b16 %v599
        %v635 = vunpack.c.l.b16 %v600
        %v636 = vunpack.c.l.b16 %v601
        %v637 = vunpack.c.l.b16 %v602
        %v638 = vpack.c.b16 %v623, %v622
        %v639 = vpack.c.b16 %v625, %v624
        %v640 = vpack.c.b16 %v627, %v626
        %v641 = vpack.c.b16 %v629, %v628
        %v642 = vpack.c.b16 %v631, %v630
        %v643 = vpack.c.b16 %v633, %v632
        %v644 = vpack.c.b16 %v635, %v634
        %v645 = vpack.c.b16 %v637, %v636
        %654 = vmatpush.bf16.msra.mxu0 %v586
        %655 = vmatpush.bf16.msra.mxu0 %v585
        %656 = vmatpush.bf16.msra.mxu0 %v584
        %657 = vmatpush.bf16.msra.mxu0 %v583
        %658 = vmatpush.bf16.msra.mxu0 %v582
        %659 = vmatpush.bf16.msra.mxu0 %v581
        %660 = vmatpush.bf16.msra.mxu0 %v580
        %661 = vmatpush.bf16.msra.mxu0 %v579
        %662 = vmatmul.bf16.gmra.mxu0 %v638
        %v663 = vpop.f32.mrf.mxu0
        %v664 = vadd.f32 %v604, %v663
        %v665 = vpop.f32.mrf.mxu0
        %v666 = vadd.f32 %v604, %v665
        %667 = vmatmul.bf16.gmra.mxu0 %v639
        %v668 = vpop.f32.mrf.mxu0
        %v669 = vadd.f32 %v604, %v668
        %v670 = vpop.f32.mrf.mxu0
        %v671 = vadd.f32 %v604, %v670
        %672 = vmatmul.bf16.gmra.mxu0 %v640
        %v673 = vpop.f32.mrf.mxu0
        %v674 = vadd.f32 %v604, %v673
        %v675 = vpop.f32.mrf.mxu0
        %v676 = vadd.f32 %v604, %v675
        %677 = vmatmul.bf16.gmra.mxu0 %v641
        %v678 = vpop.f32.mrf.mxu0
        %v679 = vadd.f32 %v604, %v678
        %v680 = vpop.f32.mrf.mxu0
        %v681 = vadd.f32 %v604, %v680
        %682 = vmatmul.bf16.gmra.mxu0 %v642
        %v683 = vpop.f32.mrf.mxu0
        %v684 = vadd.f32 %v604, %v683
        %v685 = vpop.f32.mrf.mxu0
        %v686 = vadd.f32 %v604, %v685
        %687 = vmatmul.bf16.gmra.mxu0 %v643
        %v688 = vpop.f32.mrf.mxu0
        %v689 = vadd.f32 %v604, %v688
        %v690 = vpop.f32.mrf.mxu0
        %v691 = vadd.f32 %v604, %v690
        %692 = vmatmul.bf16.gmra.mxu0 %v644
        %v693 = vpop.f32.mrf.mxu0
        %v694 = vadd.f32 %v604, %v693
        %v695 = vpop.f32.mrf.mxu0
        %v696 = vadd.f32 %v604, %v695
        %697 = vmatmul.bf16.gmra.mxu0 %v645
        %v698 = vpop.f32.mrf.mxu0
        %v699 = vadd.f32 %v604, %v698
        %v700 = vpop.f32.mrf.mxu0
        %v701 = vadd.f32 %v604, %v700
        %702 = vdwg.mxu0
        %v703 = vtanh.pop %v664
        %v704 = vtanh.pop %v666
        %v705 = vtanh.pop %v669
        %v706 = vtanh.pop %v671
        %v707 = vtanh.pop %v674
        %v708 = vtanh.pop %v676
        %v709 = vtanh.pop %v679
        %v710 = vtanh.pop %v681
        %v711 = vtanh.pop %v684
        %v712 = vtanh.pop %v686
        %v713 = vtanh.pop %v689
        %v714 = vtanh.pop %v691
        %v715 = vtanh.pop %v694
        %v716 = vtanh.pop %v696
        %v717 = vtanh.pop %v699
        %v718 = vtanh.pop %v701
        %v719 = vlaneseq
        %v720 = vshrl.u32 %v719, 7
        %v721 = vadd.s32 %v720, 8
        %v722 = vadd.s32 %v720, 16
        %v723 = vadd.s32 %v720, 24
        %v724 = vadd.s32 %v720, 32
        %v725 = vadd.s32 %v720, 40
        %v726 = vadd.s32 %v720, 48
        %v727 = vadd.s32 %v720, 56
        %v728 = vadd.s32 %v720, 64
        %v729 = vadd.s32 %v720, 72
        %v730 = vadd.s32 %v720, 80
        %v731 = vadd.s32 %v720, 88
        %v732 = vadd.s32 %v720, 96
        %v733 = vadd.s32 %v720, 104
        %v734 = vadd.s32 %v720, 112
        %v735 = vadd.s32 %v720, 120
        %vm736 = vcmp.lt.s32.totalorder %v720, 32
        %vm737 = vcmp.lt.s32.totalorder %v721, 32
        %vm738 = vcmp.lt.s32.totalorder %v722, 32
        %vm739 = vcmp.lt.s32.totalorder %v723, 32
        %vm740 = vcmp.lt.s32.totalorder %v724, 32
        %vm741 = vcmp.lt.s32.totalorder %v725, 32
        %vm742 = vcmp.lt.s32.totalorder %v726, 32
        %vm743 = vcmp.lt.s32.totalorder %v727, 32
        %vm744 = vcmp.lt.s32.totalorder %v728, 32
        %vm745 = vcmp.lt.s32.totalorder %v729, 32
        %vm746 = vcmp.lt.s32.totalorder %v730, 32
        %vm747 = vcmp.lt.s32.totalorder %v731, 32
        %vm748 = vcmp.lt.s32.totalorder %v732, 32
        %vm749 = vcmp.lt.s32.totalorder %v733, 32
        %vm750 = vcmp.lt.s32.totalorder %v734, 32
        %vm751 = vcmp.lt.s32.totalorder %v735, 32
        %v752 = vsel %vm736, 0.03125, 0.0
        %v753 = vsel %vm737, 0.03125, 0.0
        %v754 = vsel %vm738, 0.03125, 0.0
        %v755 = vsel %vm739, 0.03125, 0.0
        %v756 = vsel %vm740, 0.03125, 0.0
        %v757 = vsel %vm741, 0.03125, 0.0
        %v758 = vsel %vm742, 0.03125, 0.0
        %v759 = vsel %vm743, 0.03125, 0.0
        %v760 = vsel %vm744, 0.03125, 0.0
        %v761 = vsel %vm745, 0.03125, 0.0
        %v762 = vsel %vm746, 0.03125, 0.0
        %v763 = vsel %vm747, 0.03125, 0.0
        %v764 = vsel %vm748, 0.03125, 0.0
        %v765 = vsel %vm749, 0.03125, 0.0
        %v766 = vsel %vm750, 0.03125, 0.0
        %v767 = vsel %vm751, 0.03125, 0.0
        %v768 = vmul.f32 %v703, %v752
        %v769 = vmul.f32 %v704, %v753
        %v770 = vmul.f32 %v705, %v754
        %v771 = vmul.f32 %v706, %v755
        %v772 = vmul.f32 %v707, %v756
        %v773 = vmul.f32 %v708, %v757
        %v774 = vmul.f32 %v709, %v758
        %v775 = vmul.f32 %v710, %v759
        %v776 = vmul.f32 %v711, %v760
        %v777 = vmul.f32 %v712, %v761
        %v778 = vmul.f32 %v713, %v762
        %v779 = vmul.f32 %v714, %v763
        %v780 = vmul.f32 %v715, %v764
        %v781 = vmul.f32 %v716, %v765
        %v782 = vmul.f32 %v717, %v766
        %v783 = vmul.f32 %v718, %v767
        %v784 = vadd.f32 %v768, %v769
        %v785 = vadd.f32 %v784, %v770
        %v786 = vadd.f32 %v785, %v771
        %v787 = vadd.f32 %v786, %v772
        %v788 = vadd.f32 %v787, %v773
        %v789 = vadd.f32 %v788, %v774
        %v790 = vadd.f32 %v789, %v775
        %v791 = vadd.f32 %v790, %v776
        %v792 = vadd.f32 %v791, %v777
        %v793 = vadd.f32 %v792, %v778
        %v794 = vadd.f32 %v793, %v779
        %v795 = vadd.f32 %v794, %v780
        %v796 = vadd.f32 %v795, %v781
        %v797 = vadd.f32 %v796, %v782
        %v798 = vadd.f32 %v797, %v783
        %v799 = vrot.slane %v798, 4
        %v800 = vadd.f32 %v798, %v799
        %v801 = vrot.slane %v800, 2
        %v802 = vadd.f32 %v800, %v801
        %v803 = vrot.slane %v802, 1
        %v804 = vadd.f32 %v802, %v803
        %v805 = vsub.f32 %v703, %v804
        %v806 = vsub.f32 %v704, %v804
        %v807 = vsub.f32 %v705, %v804
        %v808 = vsub.f32 %v706, %v804
        %v809 = vsub.f32 %v707, %v804
        %v810 = vsub.f32 %v708, %v804
        %v811 = vsub.f32 %v709, %v804
        %v812 = vsub.f32 %v710, %v804
        %v813 = vsub.f32 %v711, %v804
        %v814 = vsub.f32 %v712, %v804
        %v815 = vsub.f32 %v713, %v804
        %v816 = vsub.f32 %v714, %v804
        %v817 = vsub.f32 %v715, %v804
        %v818 = vsub.f32 %v716, %v804
        %v819 = vsub.f32 %v717, %v804
        %v820 = vsub.f32 %v718, %v804
        %v821 = vmul.f32 %v805, %v805
        %v822 = vmul.f32 %v806, %v806
        %v823 = vmul.f32 %v807, %v807
        %v824 = vmul.f32 %v808, %v808
        %v825 = vmul.f32 %v809, %v809
        %v826 = vmul.f32 %v810, %v810
        %v827 = vmul.f32 %v811, %v811
        %v828 = vmul.f32 %v812, %v812
        %v829 = vmul.f32 %v813, %v813
        %v830 = vmul.f32 %v814, %v814
        %v831 = vmul.f32 %v815, %v815
        %v832 = vmul.f32 %v816, %v816
        %v833 = vmul.f32 %v817, %v817
        %v834 = vmul.f32 %v818, %v818
        %v835 = vmul.f32 %v819, %v819
        %v836 = vmul.f32 %v820, %v820
        %v837 = vmul.f32 %v821, %v752
        %v838 = vmul.f32 %v822, %v753
        %v839 = vmul.f32 %v823, %v754
        %v840 = vmul.f32 %v824, %v755
        %v841 = vmul.f32 %v825, %v756
        %v842 = vmul.f32 %v826, %v757
        %v843 = vmul.f32 %v827, %v758
        %v844 = vmul.f32 %v828, %v759
        %v845 = vmul.f32 %v829, %v760
        %v846 = vmul.f32 %v830, %v761
        %v847 = vmul.f32 %v831, %v762
        %v848 = vmul.f32 %v832, %v763
        %v849 = vmul.f32 %v833, %v764
        %v850 = vmul.f32 %v834, %v765
        %v851 = vmul.f32 %v835, %v766
        %v852 = vmul.f32 %v836, %v767
        %v853 = vadd.f32 %v837, %v838
        %v854 = vadd.f32 %v853, %v839
        %v855 = vadd.f32 %v854, %v840
        %v856 = vadd.f32 %v855, %v841
        %v857 = vadd.f32 %v856, %v842
        %v858 = vadd.f32 %v857, %v843
        %v859 = vadd.f32 %v858, %v844
        %v860 = vadd.f32 %v859, %v845
        %v861 = vadd.f32 %v860, %v846
        %v862 = vadd.f32 %v861, %v847
        %v863 = vadd.f32 %v862, %v848
        %v864 = vadd.f32 %v863, %v849
        %v865 = vadd.f32 %v864, %v850
        %v866 = vadd.f32 %v865, %v851
        %v867 = vadd.f32 %v866, %v852
        %v868 = vrot.slane %v867, 4
        %v869 = vadd.f32 %v867, %v868
        %v870 = vrot.slane %v869, 2
        %v871 = vadd.f32 %v869, %v870
        %v872 = vrot.slane %v871, 1
        %v873 = vadd.f32 %v871, %v872
        %v874 = vadd.f32 %v873, 1e-05
        %v875 = vrsqrt.pop %v874
        %v876 = vmul.f32 %v875, %v874
        %v877 = vmul.f32 %v876, %v875
        %v878 = vmul.f32 0.5, %v877
        %v879 = vsub.f32 1.5, %v878
        %v880 = vmul.f32 %v875, %v879
        %vm881 = vweird.f32 %v874
        %vm882 = vweird.f32 %v875
        %vm883 = vmor %vm881, %vm882
        %v884 = vsel %vm883, %v875, %v880
        %v885 = vmul.f32 %v805, %v884
        %v886 = vmul.f32 %v806, %v884
        %v887 = vmul.f32 %v807, %v884
        %v888 = vmul.f32 %v808, %v884
        %v889 = vmul.f32 %v809, %v884
        %v890 = vmul.f32 %v810, %v884
        %v891 = vmul.f32 %v811, %v884
        %v892 = vmul.f32 %v812, %v884
        %v893 = vmul.f32 %v813, %v884
        %v894 = vmul.f32 %v814, %v884
        %v895 = vmul.f32 %v815, %v884
        %v896 = vmul.f32 %v816, %v884
        %v897 = vmul.f32 %v817, %v884
        %v898 = vmul.f32 %v818, %v884
        %v899 = vmul.f32 %v819, %v884
        %v900 = vmul.f32 %v820, %v884
        %v902 = vperm.slane %v432, 0
        %v904 = vmul.f32 %v885, %v902
        %v905 = vmul.f32 %v886, %v902
        %v906 = vmul.f32 %v887, %v902
        %v907 = vmul.f32 %v888, %v902
        %v908 = vmul.f32 %v889, %v902
        %v909 = vmul.f32 %v890, %v902
        %v910 = vmul.f32 %v891, %v902
        %v911 = vmul.f32 %v892, %v902
        %v912 = vmul.f32 %v893, %v902
        %v913 = vmul.f32 %v894, %v902
        %v914 = vmul.f32 %v895, %v902
        %v915 = vmul.f32 %v896, %v902
        %v916 = vmul.f32 %v897, %v902
        %v917 = vmul.f32 %v898, %v902
        %v918 = vmul.f32 %v899, %v902
        %v919 = vmul.f32 %v900, %v902
        %v921 = vperm.slane %v433, 0
        %v923 = vadd.f32 %v904, %v921
        %v924 = vadd.f32 %v905, %v921
        %v925 = vadd.f32 %v906, %v921
        %v926 = vadd.f32 %v907, %v921
        %v927 = vadd.f32 %v908, %v921
        %v928 = vadd.f32 %v909, %v921
        %v929 = vadd.f32 %v910, %v921
        %v930 = vadd.f32 %v911, %v921
        %v931 = vadd.f32 %v912, %v921
        %v932 = vadd.f32 %v913, %v921
        %v933 = vadd.f32 %v914, %v921
        %v934 = vadd.f32 %v915, %v921
        %v935 = vadd.f32 %v916, %v921
        %v936 = vadd.f32 %v917, %v921
        %v937 = vadd.f32 %v918, %v921
        %v938 = vadd.f32 %v919, %v921
        %v939 = vpack.c.bf16 %v923, %v923
        %v940 = vpack.c.bf16 %v924, %v924
        %v941 = vpack.c.bf16 %v925, %v925
        %v942 = vpack.c.bf16 %v926, %v926
        %v943 = vpack.c.bf16 %v927, %v927
        %v944 = vpack.c.bf16 %v928, %v928
        %v945 = vpack.c.bf16 %v929, %v929
        %v946 = vpack.c.bf16 %v930, %v930
        %v947 = vpack.c.bf16 %v931, %v931
        %v948 = vpack.c.bf16 %v932, %v932
        %v949 = vpack.c.bf16 %v933, %v933
        %v950 = vpack.c.bf16 %v934, %v934
        %v951 = vpack.c.bf16 %v935, %v935
        %v952 = vpack.c.bf16 %v936, %v936
        %v953 = vpack.c.bf16 %v937, %v937
        %v954 = vpack.c.bf16 %v938, %v938
        %955 = vst [vmem:[#allocation2] sm:$0xf] %v939
        %956 = vst [vmem:[#allocation2 + $0x4] sm:$0xf] %v940
        %957 = vst [vmem:[#allocation2 + $0x8] sm:$0xf] %v941
        %958 = vst [vmem:[#allocation2 + $0xc] sm:$0xf] %v942
        %959 = vst [vmem:[#allocation2 + $0x10] sm:$0xf] %v943
        %960 = vst [vmem:[#allocation2 + $0x14] sm:$0xf] %v944
        %961 = vst [vmem:[#allocation2 + $0x18] sm:$0xf] %v945
        %962 = vst [vmem:[#allocation2 + $0x1c] sm:$0xf] %v946
        %963 = vst [vmem:[#allocation2 + $0x20] sm:$0xf] %v947
        %964 = vst [vmem:[#allocation2 + $0x24] sm:$0xf] %v948
        %965 = vst [vmem:[#allocation2 + $0x28] sm:$0xf] %v949
        %966 = vst [vmem:[#allocation2 + $0x2c] sm:$0xf] %v950
        %967 = vst [vmem:[#allocation2 + $0x30] sm:$0xf] %v951
        %968 = vst [vmem:[#allocation2 + $0x34] sm:$0xf] %v952
        %969 = vst [vmem:[#allocation2 + $0x38] sm:$0xf] %v953
        %970 = vst [vmem:[#allocation2 + $0x3c] sm:$0xf] %v954
        %971 = vst [vmem:[%s356] sm:$0xff] %v923
        %972 = vst [vmem:[%s356 + $0x8] sm:$0xff] %v924
        %973 = vst [vmem:[%s356 + $0x10] sm:$0xff] %v925
        %974 = vst [vmem:[%s356 + $0x18] sm:$0xff] %v926
        %975 = vst [vmem:[%s356 + $0x20] sm:$0xff] %v927
        %976 = vst [vmem:[%s356 + $0x28] sm:$0xff] %v928
        %977 = vst [vmem:[%s356 + $0x30] sm:$0xff] %v929
        %978 = vst [vmem:[%s356 + $0x38] sm:$0xff] %v930
        %979 = vst [vmem:[%s356 + $0x40] sm:$0xff] %v931
        %980 = vst [vmem:[%s356 + $0x48] sm:$0xff] %v932
        %981 = vst [vmem:[%s356 + $0x50] sm:$0xff] %v933
        %982 = vst [vmem:[%s356 + $0x58] sm:$0xff] %v934
        %983 = vst [vmem:[%s356 + $0x60] sm:$0xff] %v935
        %984 = vst [vmem:[%s356 + $0x68] sm:$0xff] %v936
        %985 = vst [vmem:[%s356 + $0x70] sm:$0xff] %v937
        %986 = vst [vmem:[%s356 + $0x78] sm:$0xff] %v938
        %s987 = sand.u32 %s176, 1
        %s988 = scalar_lea.sflag [#allocation5], %s987
        %s989 = sand.u32 %s176, 1
        %s990 = smul.addr %s989, 128
        %s991 = scalar_lea.vmem [#allocation10], %s990
        // Predicated region
        $region65: #{tpu_custom_call.1} parent=43 // pred_check
          %p992 = pneg %p186
        $region66: #{tpu_custom_call.1} parent=43 // pred_check_branch
          %994 = sbr.rel (%p992) target = $region68
        $region67: #{tpu_custom_call.1} parent=43 // pred_region
          %996 = vsyncadd %s988, 0
          %s997 = smul.addr %s22, 16
          %s998 = smul.addr %s997, 8
          %s999 = scalar_lea.hbm %s6, %s998
          %s1000 = sshll.u32 %s991, 4
          %s1001 = int_to_ptr.vmem [resolvable:$true] %s1000
          %s1002 = sshll.u32 %s999, 4
          %s1003 = int_to_ptr.hbm [resolvable:$true] %s1002
          %1008 = dma.vmem_to_hbm [thread:$0]  %s1001, 2048, %s1003, %s988, 128, 128, 8
        $region68: #{tpu_custom_call.1} parent=43 // pred_fallthru
          _
      $region44: #{tpu_custom_call.1} parent=5 // pred_fallthru
        _
      %p1009 = scmp.le.s32.totalorder 2, %s17
      // Predicated region
      $region69: #{tpu_custom_call.1} parent=5 // pred_check
        %p1010 = pneg %p1009
      $region70: #{tpu_custom_call.1} parent=5 // pred_check_branch
        %1012 = sbr.rel (%p1010) target = $region72
      $region71: #{tpu_custom_call.1} parent=5 // pred_region
        %s1013 = ssub.s32 %s17, 2
        // Predicated region
        $region73: #{tpu_custom_call.1} parent=71 // pred_check
          %p1014 = pneg %p192
        $region74: #{tpu_custom_call.1} parent=71 // pred_check_branch
          %1016 = sbr.rel (%p1014) target = $region76
        $region75: #{tpu_custom_call.1} parent=71 // pred_region
          %s1017 = sand.u32 %s177, 1
          %s1018 = scalar_lea.sflag [#allocation5], %s1017
          %s1019 = sand.u32 %s177, 1
          %s1020 = smul.addr %s1019, 128
          %s1021 = scalar_lea.vmem [#allocation10], %s1020
          %1023 = dma.done %s1018, 2048
        $region76: #{tpu_custom_call.1} parent=71 // pred_fallthru
          _
      $region72: #{tpu_custom_call.1} parent=5 // pred_fallthru
        _
    $region6: #{tpu_custom_call.1} parent=1 // loop_footer
      %s21 = sadd.s32 1, %s17
    $region7: #{tpu_custom_call.1} parent=1 // loop_footer_branch
      %16 = sbr.rel target = $region3
    $region8: #{tpu_custom_call.1} parent=1 // loop_exit
      _
    %1024 = vsyncpa [#allocation4], 1
    %s1025 = scalar_lea.sflag [#allocation4], 1
    %1026 = vsyncpa %s1025, 1
    %1027 = vsyncpa [#allocation7], 1
    %1028 = vsyncpa [#allocation5], 1
    %s1029 = scalar_lea.sflag [#allocation5], 1
    %1030 = vsyncpa %s1029, 1

</llo_original>
